<compile_context>
chip_gen: v7x
topology: tpu7x:2x2x1
jax: 0.10.0
libtpu: 0.0.40
codegen_flags: <defaults>
</compile_context>

<pallas_src>
import jax
import jax.numpy as jnp
from jax import lax
from jax.experimental import pallas as pl
from jax.experimental.pallas import tpu as pltpu


def _round_up(x, m):
    return ((x + m - 1) // m) * m


def decoder_rnn_kernel(x_ref, h0_ref, wih_ref, whh_ref, bgi_ref, bhhn_ref,
                       wout_hbm, bout_ref, logp_ref, hn_ref,
                       gi_scratch, hs_scratch, wout_vmem, wout_sem):
    T, B, F = x_ref.shape          # padded: (T, 8, 128), bf16
    H = h0_ref.shape[1]            # padded: 128
    V = bout_ref.shape[1]          # padded: 128

    # Start the (largest) output-projection weight copy now; it is only needed after the
    # T sequential GRU steps, so its HBM->VMEM DMA hides behind the recurrence.
    wout_cp = pltpu.make_async_copy(wout_hbm, wout_vmem, wout_sem)
    wout_cp.start()

    # ---- Hoisted input-to-hidden path: one big MXU matmul for all timesteps ----
    x_relu = jnp.maximum(x_ref[...], 0.0).reshape(T * B, F)               # bf16
    gi = jnp.dot(x_relu, wih_ref[...],
                 preferred_element_type=jnp.float32) + bgi_ref[...]       # (T*B, 3H) f32
    gi_scratch[...] = gi.reshape(T, B, 3 * H).astype(jnp.bfloat16)

    # Hoist the n-gate hidden bias broadcast out of the recurrence.
    b_hh_n = jnp.broadcast_to(bhhn_ref[...], (B, H))
    whh = whh_ref[...]                                                    # (H, 3H) bf16

    # ---- Sequential GRU recurrence (only h @ W_hh stays on the critical path) ----
    h = h0_ref[...]                                                       # (B, H) f32
    for t in range(T):   # T is static & tiny: full unroll, all indices static
        gi_t = gi_scratch[t].astype(jnp.float32)                          # (B, 3H)
        gh = jnp.dot(h.astype(jnp.bfloat16), whh,
                     preferred_element_type=jnp.float32)                  # (B, 3H)
        r = jax.nn.sigmoid(gi_t[:, :H] + gh[:, :H])
        z = jax.nn.sigmoid(gi_t[:, H:2 * H] + gh[:, H:2 * H])
        n = jnp.tanh(gi_t[:, 2 * H:] + r * (gh[:, 2 * H:] + b_hh_n))
        h = (1.0 - z) * n + z * h                                         # (B, H) f32
        hs_scratch[t] = h                                                 # full-tile vst
    hn_ref[...] = h

    # ---- Output projection: one (B*T, H) x (H, V) matmul + log_softmax ----
    # Only the H-wide hidden slab is transposed to batch-major (cheap, one-time, off the
    # serial path); the V-wide log-prob slab is produced directly in the output layout.
    hs_bm = jnp.transpose(hs_scratch[...], (1, 0, 2)).reshape(B * T, H)
    wout_cp.wait()
    logits = jnp.dot(hs_bm.astype(jnp.bfloat16), wout_vmem[...],
                     preferred_element_type=jnp.float32) + bout_ref[...]  # (B*T, V)
    m = jnp.max(logits, axis=-1, keepdims=True)
    lse = jnp.log(jnp.sum(jnp.exp(logits - m), axis=-1, keepdims=True))
    logp_ref[...] = (logits - m - lse).reshape(B, T, V)


def _prep_kernel_params(params, F_pad, H_pad, V_pad):
    """Fuse/pad the PyTorch-layout params into the kernel layout."""
    emb, wih, whh, bih, bhh, wout, bout = params

    def pad2(w, r, c):
        return jnp.pad(w, ((0, r - w.shape[0]), (0, c - w.shape[1])))

    # Fused gate weights, gate order [r, z, n], each chunk H_pad wide.
    wih_cat = jnp.concatenate([pad2(wih[g], F_pad, H_pad) for g in range(3)], axis=1)
    whh_cat = jnp.concatenate([pad2(whh[g], H_pad, H_pad) for g in range(3)], axis=1)
    # Bias folding: r/z use (b_ih + b_hh); n keeps b_hh separate (inside r * (...)).
    b_gi_cat = jnp.concatenate([pad2(bih[0] + bhh[0], 1, H_pad),
                                pad2(bih[1] + bhh[1], 1, H_pad),
                                pad2(bih[2], 1, H_pad)], axis=1)          # (1, 3H_pad)
    b_hh_n = pad2(bhh[2], 1, H_pad)                                       # (1, H_pad)
    # Output projection; padded vocab columns get a huge negative bias so they vanish
    # from the softmax denominator.
    wout_p = pad2(wout, H_pad, V_pad)
    V = wout.shape[1]
    bout_p = jnp.pad(bout, ((0, 0), (0, V_pad - V)), constant_values=-1e30)
    # Embedding table in bf16: the gather then produces a bf16 activation stream (half
    # the HBM->VMEM bytes); gi was already computed from a bf16 cast, so no numerics change.
    emb_pad = jnp.pad(emb, ((0, 0), (0, F_pad - emb.shape[1]))).astype(jnp.bfloat16)
    return (emb_pad,
            wih_cat.astype(jnp.bfloat16), whh_cat.astype(jnp.bfloat16),
            b_gi_cat.astype(jnp.float32), b_hh_n.astype(jnp.float32),
            wout_p.astype(jnp.bfloat16), bout_p.astype(jnp.float32))


def decoder_rnn_forward(tokens, hidden, params):
    """tokens: (B, T) int32; hidden: (1, B, H) float32 (numLayers == 1)."""
    emb, wih, whh, bih, bhh, wout, bout = params
    B, T = tokens.shape
    F = emb.shape[1]
    H = hidden.shape[-1]
    V = wout.shape[1]

    B_pad = _round_up(max(B, 8), 8)
    F_pad = _round_up(F, 128)
    H_pad = _round_up(H, 128)
    V_pad = _round_up(V, 128)

    (emb_pad, wih_cat, whh_cat, b_gi_cat, b_hh_n,
     wout_p, bout_p) = _prep_kernel_params(params, F_pad, H_pad, V_pad)

    # Time-major embedding gather directly (no full-tensor transpose); ReLU runs in-kernel.
    x_tm = emb_pad[tokens.T]                                        # (T, B, F_pad) bf16
    x_tm = jnp.pad(x_tm, ((0, 0), (0, B_pad - B), (0, 0)))          # (T, B_pad, F_pad)
    h0_pad = jnp.pad(hidden[0], ((0, B_pad - B), (0, H_pad - H)))   # (B_pad, H_pad) f32

    # VMEM residency estimate (BlockSpec inputs/outputs are double-buffered) + headroom.
    bytes_in = 2 * (x_tm.size * 2 + h0_pad.size * 4
                    + wih_cat.size * 2 + whh_cat.size * 2
                    + b_gi_cat.size * 4 + b_hh_n.size * 4 + bout_p.size * 4)
    bytes_out = 2 * (B_pad * T * V_pad * 4 + B_pad * H_pad * 4)
    bytes_scratch = (T * B_pad * 3 * H_pad * 2      # gi (bf16)
                     + T * B_pad * H_pad * 4        # hidden states (f32)
                     + H_pad * V_pad * 2)           # wout staging buffer (bf16)
    vmem_limit = max(bytes_in + bytes_out + bytes_scratch + (4 << 20), 16 << 20)

    logp_bt, hn_pad = pl.pallas_call(
        decoder_rnn_kernel,
        grid=(1,),
        in_specs=[
            pl.BlockSpec((T, B_pad, F_pad), lambda i: (0, 0, 0)),
            pl.BlockSpec((B_pad, H_pad), lambda i: (0, 0)),
            pl.BlockSpec((F_pad, 3 * H_pad), lambda i: (0, 0)),
            pl.BlockSpec((H_pad, 3 * H_pad), lambda i: (0, 0)),
            pl.BlockSpec((1, 3 * H_pad), lambda i: (0, 0)),
            pl.BlockSpec((1, H_pad), lambda i: (0, 0)),
            pl.BlockSpec(memory_space=pl.ANY),      # wout stays in HBM; DMA'd in-kernel
            pl.BlockSpec((1, V_pad), lambda i: (0, 0)),
        ],
        out_specs=[
            pl.BlockSpec((B_pad, T, V_pad), lambda i: (0, 0, 0)),
            pl.BlockSpec((B_pad, H_pad), lambda i: (0, 0)),
        ],
        out_shape=[
            jax.ShapeDtypeStruct((B_pad, T, V_pad), jnp.float32),
            jax.ShapeDtypeStruct((B_pad, H_pad), jnp.float32),
        ],
        scratch_shapes=[
            pltpu.VMEM((T, B_pad, 3 * H_pad), jnp.bfloat16),  # hoisted gi (bf16 residency)
            pltpu.VMEM((T, B_pad, H_pad), jnp.float32),       # per-step hidden states
            pltpu.VMEM((H_pad, V_pad), jnp.bfloat16),         # wout staging buffer
            pltpu.SemaphoreType.DMA(()),                      # wout copy completion
        ],
        compiler_params=pltpu.CompilerParams(
            dimension_semantics=("arbitrary",),
            vmem_limit_bytes=int(vmem_limit)),
    )(x_tm, h0_pad, wih_cat, whh_cat, b_gi_cat, b_hh_n, wout_p, bout_p)

    output = logp_bt[:B, :, :V]                         # (B, T, V) == log_softmax(out(gru_out))
    hn_out = hn_pad[:B, :H][None]                       # (1, B, H) == GRU hn
    zeros = jnp.zeros((B, 1, T), dtype=jnp.float32)     # torch.zeros([B, 1, T])
    return output, hn_out, zeros


def decoder_rnn_reference(tokens, hidden, params):
    """Pure-JAX reference (same bf16-MXU / f32-accumulate numerics as the kernel)."""
    emb, wih, whh, bih, bhh, wout, bout = params
    T = tokens.shape[1]
    x = jnp.maximum(emb[tokens], 0.0)                   # (B, T, F)
    h = hidden[0]

    def mm(a, w):
        return jnp.dot(a.astype(jnp.bfloat16), w.astype(jnp.bfloat16),
                       preferred_element_type=jnp.float32)

    hs = []
    for t in range(T):
        x_t = x[:, t, :]
        gi_r = mm(x_t, wih[0]) + bih[0]
        gi_z = mm(x_t, wih[1]) + bih[1]
        gi_n = mm(x_t, wih[2]) + bih[2]
        gh_r = mm(h, whh[0]) + bhh[0]
        gh_z = mm(h, whh[1]) + bhh[1]
        gh_n = mm(h, whh[2]) + bhh[2]
        r = jax.nn.sigmoid(gi_r + gh_r)
        z = jax.nn.sigmoid(gi_z + gh_z)
        n = jnp.tanh(gi_n + r * gh_n)
        h = (1.0 - z) * n + z * h
        hs.append(h)
    hs = jnp.stack(hs, axis=1)                          # (B, T, H)
    logits = mm(hs, wout) + bout
    return jax.nn.log_softmax(logits, axis=-1), h[None]


def make_params(key, feature_size, hidden_size, output_size):
    """Deterministic synthetic parameters (shapes match nn.Embedding / nn.GRU / nn.Linear)."""
    ks = jax.random.split(key, 7)
    k = 1.0 / jnp.sqrt(hidden_size)
    emb = jax.random.normal(ks[0], (output_size, feature_size), jnp.float32)
    wih = jax.random.uniform(ks[1], (3, feature_size, hidden_size), jnp.float32, -k, k)
    whh = jax.random.uniform(ks[2], (3, hidden_size, hidden_size), jnp.float32, -k, k)
    bih = jax.random.uniform(ks[3], (3, 1, hidden_size), jnp.float32, -k, k)
    bhh = jax.random.uniform(ks[4], (3, 1, hidden_size), jnp.float32, -k, k)
    wout = jax.random.uniform(ks[5], (hidden_size, output_size), jnp.float32, -k, k)
    bout = jax.random.uniform(ks[6], (1, output_size), jnp.float32, -k, k)
    return (emb, wih, whh, bih, bhh, wout, bout)


if __name__ == "__main__":
    B, T = 2, 8
    F = H = 32          # featureSize == hiddenSize (required by the PyTorch module)
    V = 64              # outputSize (vocab)

    key = jax.random.PRNGKey(0)
    k_params, k_tok, k_hid = jax.random.split(key, 3)

    params = make_params(k_params, F, H, V)
    tokens = jax.random.randint(k_tok, (B, T), 0, V, dtype=jnp.int32)
    hidden0 = jax.random.normal(k_hid, (1, B, H), jnp.float32)

    out, hn, zeros = decoder_rnn_forward(tokens, hidden0, params)
    jax.block_until_ready((out, hn, zeros))

    assert out.shape == (B, T, V)
    assert hn.shape == (1, B, H)
    assert zeros.shape == (B, 1, T)
    # log_softmax rows should sum to ~1 in prob space
    assert bool(jnp.allclose(jnp.sum(jnp.exp(out), axis=-1), 1.0, atol=1e-4))

    # Numerical check against a pure-JAX reference with matching bf16-MXU numerics.
    ref_out, ref_hn = decoder_rnn_reference(tokens, hidden0, params)
    assert bool(jnp.max(jnp.abs(out - ref_out)) < 1e-1)
    assert bool(jnp.max(jnp.abs(hn - ref_hn)) < 1e-1)

    print("KERNEL_OK")
</pallas_src>

<mosaic_0001>
module attributes {stable_mosaic.version = 11 : i64} {
  func.func @decoder_rnn_kernel(%arg0: i32, %arg1: memref<8x8x128xbf16, #tpu.memory_space<vmem>>, %arg2: memref<8x128xf32, #tpu.memory_space<vmem>>, %arg3: memref<128x384xbf16, #tpu.memory_space<vmem>>, %arg4: memref<128x384xbf16, #tpu.memory_space<vmem>>, %arg5: memref<1x384xf32, #tpu.memory_space<vmem>>, %arg6: memref<1x128xf32, #tpu.memory_space<vmem>>, %arg7: memref<128x128xbf16, #tpu.memory_space<any>>, %arg8: memref<1x128xf32, #tpu.memory_space<vmem>>, %arg9: memref<8x8x128xf32, #tpu.memory_space<vmem>>, %arg10: memref<8x128xf32, #tpu.memory_space<vmem>>, %arg11: memref<8x8x384xbf16, #tpu.memory_space<vmem>>, %arg12: memref<8x8x128xf32, #tpu.memory_space<vmem>>, %arg13: memref<128x128xbf16, #tpu.memory_space<vmem>>, %arg14: memref<!tpu.dma_semaphore, #tpu.memory_space<semaphore_mem>>) attributes {dimension_semantics = [#tpu.dimension_semantics<arbitrary>], iteration_bounds = array<i64: 1>, scalar_prefetch = 0 : i64, scratch_operands = 4 : i64, tpu.core_type = #tpu.core_type<tc>, window_params = [{pipeline_mode = #tpu.pipeline_mode<synchronous>, transform_indices = @transform_0, window_bounds = array<i64: 8, 8, 128>}, {pipeline_mode = #tpu.pipeline_mode<synchronous>, transform_indices = @transform_1, window_bounds = array<i64: 8, 128>}, {pipeline_mode = #tpu.pipeline_mode<synchronous>, transform_indices = @transform_2, window_bounds = array<i64: 128, 384>}, {pipeline_mode = #tpu.pipeline_mode<synchronous>, transform_indices = @transform_3, window_bounds = array<i64: 128, 384>}, {pipeline_mode = #tpu.pipeline_mode<synchronous>, transform_indices = @transform_4, window_bounds = array<i64: 1, 384>}, {pipeline_mode = #tpu.pipeline_mode<synchronous>, transform_indices = @transform_5, window_bounds = array<i64: 1, 128>}, {}, {pipeline_mode = #tpu.pipeline_mode<synchronous>, transform_indices = @transform_7, window_bounds = array<i64: 1, 128>}, {pipeline_mode = #tpu.pipeline_mode<synchronous>, transform_indices = @transform_8, window_bounds = array<i64: 8, 8, 128>}, {pipeline_mode = #tpu.pipeline_mode<synchronous>, transform_indices = @transform_9, window_bounds = array<i64: 8, 128>}]} {
    tpu.enqueue_dma source(%arg7 : memref<128x128xbf16, #tpu.memory_space<any>>) target(%arg13 : memref<128x128xbf16, #tpu.memory_space<vmem>>) target_semaphore(%arg14 : memref<!tpu.dma_semaphore, #tpu.memory_space<semaphore_mem>>)
    %c0 = arith.constant 0 : index
    %c0_0 = arith.constant 0 : index
    %c0_1 = arith.constant 0 : index
    %0 = vector.load %arg1[%c0, %c0_0, %c0_1] : memref<8x8x128xbf16, #tpu.memory_space<vmem>>, vector<8x8x128xbf16>
    %cst = arith.constant 0.000000e+00 : bf16
    %1 = vector.broadcast %cst : bf16 to vector<8x8x128xbf16>
    %2 = arith.maximumf %0, %1 : vector<8x8x128xbf16>
    %3 = vector.shape_cast %2 : vector<8x8x128xbf16> to vector<64x128xbf16>
    %c0_2 = arith.constant 0 : index
    %c0_3 = arith.constant 0 : index
    %4 = vector.load %arg3[%c0_2, %c0_3] : memref<128x384xbf16, #tpu.memory_space<vmem>>, vector<128x384xbf16>
    %cst_4 = arith.constant dense<0.000000e+00> : vector<64x384xf32>
    %5 = tpu.matmul %3, %4, %cst_4 {dimension_numbers = #tpu.dot_dimension_numbers<[1], [0], [0], [1], [0, 0, 1, 1], [], []>} : vector<64x128xbf16>, vector<128x384xbf16>, vector<64x384xf32> -> vector<64x384xf32>
    %c0_5 = arith.constant 0 : index
    %c0_6 = arith.constant 0 : index
    %6 = vector.load %arg5[%c0_5, %c0_6] : memref<1x384xf32, #tpu.memory_space<vmem>>, vector<1x384xf32>
    %7 = vector.broadcast %6 : vector<1x384xf32> to vector<64x384xf32>
    %8 = arith.addf %5, %7 : vector<64x384xf32>
    %9 = vector.shape_cast %8 : vector<64x384xf32> to vector<8x8x384xf32>
    %10 = arith.truncf %9 : vector<8x8x384xf32> to vector<8x8x384xbf16>
    %c0_7 = arith.constant 0 : index
    %c0_8 = arith.constant 0 : index
    %c0_9 = arith.constant 0 : index
    %11 = vector.load %arg11[%c0_7, %c0_8, %c0_9] : memref<8x8x384xbf16, #tpu.memory_space<vmem>>, vector<8x8x384xbf16>
    tpu.vector_store %arg11[%c0_7, %c0_8, %c0_9], %10 {strides = array<i32>} : memref<8x8x384xbf16, #tpu.memory_space<vmem>>, vector<8x8x384xbf16>,
    %c0_10 = arith.constant 0 : index
    %c0_11 = arith.constant 0 : index
    %12 = vector.load %arg6[%c0_10, %c0_11] : memref<1x128xf32, #tpu.memory_space<vmem>>, vector<1x128xf32>
    %13 = vector.shape_cast %12 : vector<1x128xf32> to vector<1x128xf32>
    %14 = vector.broadcast %13 : vector<1x128xf32> to vector<8x128xf32>
    %c0_12 = arith.constant 0 : index
    %c0_13 = arith.constant 0 : index
    %15 = vector.load %arg4[%c0_12, %c0_13] : memref<128x384xbf16, #tpu.memory_space<vmem>>, vector<128x384xbf16>
    %c0_14 = arith.constant 0 : index
    %c0_15 = arith.constant 0 : index
    %16 = vector.load %arg2[%c0_14, %c0_15] : memref<8x128xf32, #tpu.memory_space<vmem>>, vector<8x128xf32>
    %c0_16 = arith.constant 0 : index
    %c0_17 = arith.constant 0 : index
    %c0_18 = arith.constant 0 : index
    %17 = vector.load %arg11[%c0_16, %c0_17, %c0_18] : memref<8x8x384xbf16, #tpu.memory_space<vmem>>, vector<1x8x384xbf16>
    %18 = vector.shape_cast %17 : vector<1x8x384xbf16> to vector<8x384xbf16>
    %19 = arith.extf %18 : vector<8x384xbf16> to vector<8x384xf32>
    %20 = arith.truncf %16 : vector<8x128xf32> to vector<8x128xbf16>
    %cst_19 = arith.constant dense<0.000000e+00> : vector<8x384xf32>
    %21 = tpu.matmul %20, %15, %cst_19 {dimension_numbers = #tpu.dot_dimension_numbers<[1], [0], [0], [1], [0, 0, 1, 1], [], []>} : vector<8x128xbf16>, vector<128x384xbf16>, vector<8x384xf32> -> vector<8x384xf32>
    %22 = vector.extract_strided_slice %19 {offsets = [0, 0], sizes = [8, 128], strides = [1, 1]} : vector<8x384xf32> to vector<8x128xf32>
    %23 = vector.extract_strided_slice %21 {offsets = [0, 0], sizes = [8, 128], strides = [1, 1]} : vector<8x384xf32> to vector<8x128xf32>
    %24 = arith.addf %22, %23 : vector<8x128xf32>
    %25 = arith.negf %24 : vector<8x128xf32>
    %26 = math.exp %25 : vector<8x128xf32>
    %cst_20 = arith.constant 1.000000e+00 : f32
    %27 = vector.broadcast %cst_20 : f32 to vector<8x128xf32>
    %28 = arith.addf %27, %26 : vector<8x128xf32>
    %29 = arith.divf %27, %28 : vector<8x128xf32>
    %30 = vector.extract_strided_slice %19 {offsets = [0, 128], sizes = [8, 128], strides = [1, 1]} : vector<8x384xf32> to vector<8x128xf32>
    %31 = vector.extract_strided_slice %21 {offsets = [0, 128], sizes = [8, 128], strides = [1, 1]} : vector<8x384xf32> to vector<8x128xf32>
    %32 = arith.addf %30, %31 : vector<8x128xf32>
    %33 = arith.negf %32 : vector<8x128xf32>
    %34 = math.exp %33 : vector<8x128xf32>
    %cst_21 = arith.constant 1.000000e+00 : f32
    %35 = vector.broadcast %cst_21 : f32 to vector<8x128xf32>
    %36 = arith.addf %35, %34 : vector<8x128xf32>
    %37 = arith.divf %35, %36 : vector<8x128xf32>
    %38 = vector.extract_strided_slice %19 {offsets = [0, 256], sizes = [8, 128], strides = [1, 1]} : vector<8x384xf32> to vector<8x128xf32>
    %39 = vector.extract_strided_slice %21 {offsets = [0, 256], sizes = [8, 128], strides = [1, 1]} : vector<8x384xf32> to vector<8x128xf32>
    %40 = arith.addf %39, %14 : vector<8x128xf32>
    %41 = arith.mulf %29, %40 : vector<8x128xf32>
    %42 = arith.addf %38, %41 : vector<8x128xf32>
    %43 = math.tanh %42 : vector<8x128xf32>
    %cst_22 = arith.constant 1.000000e+00 : f32
    %44 = vector.broadcast %cst_22 : f32 to vector<8x128xf32>
    %45 = arith.subf %44, %37 : vector<8x128xf32>
    %46 = arith.mulf %45, %43 : vector<8x128xf32>
    %47 = arith.mulf %37, %16 : vector<8x128xf32>
    %48 = arith.addf %46, %47 : vector<8x128xf32>
    %c0_23 = arith.constant 0 : index
    %c0_24 = arith.constant 0 : index
    %c0_25 = arith.constant 0 : index
    %49 = vector.load %arg12[%c0_23, %c0_24, %c0_25] : memref<8x8x128xf32, #tpu.memory_space<vmem>>, vector<1x8x128xf32>
    %50 = vector.shape_cast %49 : vector<1x8x128xf32> to vector<8x128xf32>
    %51 = vector.shape_cast %48 : vector<8x128xf32> to vector<1x8x128xf32>
    tpu.vector_store %arg12[%c0_23, %c0_24, %c0_25], %51 {strides = array<i32>} : memref<8x8x128xf32, #tpu.memory_space<vmem>>, vector<1x8x128xf32>,
    %c1 = arith.constant 1 : index
    %c0_26 = arith.constant 0 : index
    %c0_27 = arith.constant 0 : index
    %52 = vector.load %arg11[%c1, %c0_26, %c0_27] : memref<8x8x384xbf16, #tpu.memory_space<vmem>>, vector<1x8x384xbf16>
    %53 = vector.shape_cast %52 : vector<1x8x384xbf16> to vector<8x384xbf16>
    %54 = arith.extf %53 : vector<8x384xbf16> to vector<8x384xf32>
    %55 = arith.truncf %48 : vector<8x128xf32> to vector<8x128xbf16>
    %cst_28 = arith.constant dense<0.000000e+00> : vector<8x384xf32>
    %56 = tpu.matmul %55, %15, %cst_28 {dimension_numbers = #tpu.dot_dimension_numbers<[1], [0], [0], [1], [0, 0, 1, 1], [], []>} : vector<8x128xbf16>, vector<128x384xbf16>, vector<8x384xf32> -> vector<8x384xf32>
    %57 = vector.extract_strided_slice %54 {offsets = [0, 0], sizes = [8, 128], strides = [1, 1]} : vector<8x384xf32> to vector<8x128xf32>
    %58 = vector.extract_strided_slice %56 {offsets = [0, 0], sizes = [8, 128], strides = [1, 1]} : vector<8x384xf32> to vector<8x128xf32>
    %59 = arith.addf %57, %58 : vector<8x128xf32>
    %60 = arith.negf %59 : vector<8x128xf32>
    %61 = math.exp %60 : vector<8x128xf32>
    %cst_29 = arith.constant 1.000000e+00 : f32
    %62 = vector.broadcast %cst_29 : f32 to vector<8x128xf32>
    %63 = arith.addf %62, %61 : vector<8x128xf32>
    %64 = arith.divf %62, %63 : vector<8x128xf32>
    %65 = vector.extract_strided_slice %54 {offsets = [0, 128], sizes = [8, 128], strides = [1, 1]} : vector<8x384xf32> to vector<8x128xf32>
    %66 = vector.extract_strided_slice %56 {offsets = [0, 128], sizes = [8, 128], strides = [1, 1]} : vector<8x384xf32> to vector<8x128xf32>
    %67 = arith.addf %65, %66 : vector<8x128xf32>
    %68 = arith.negf %67 : vector<8x128xf32>
    %69 = math.exp %68 : vector<8x128xf32>
    %cst_30 = arith.constant 1.000000e+00 : f32
    %70 = vector.broadcast %cst_30 : f32 to vector<8x128xf32>
    %71 = arith.addf %70, %69 : vector<8x128xf32>
    %72 = arith.divf %70, %71 : vector<8x128xf32>
    %73 = vector.extract_strided_slice %54 {offsets = [0, 256], sizes = [8, 128], strides = [1, 1]} : vector<8x384xf32> to vector<8x128xf32>
    %74 = vector.extract_strided_slice %56 {offsets = [0, 256], sizes = [8, 128], strides = [1, 1]} : vector<8x384xf32> to vector<8x128xf32>
    %75 = arith.addf %74, %14 : vector<8x128xf32>
    %76 = arith.mulf %64, %75 : vector<8x128xf32>
    %77 = arith.addf %73, %76 : vector<8x128xf32>
    %78 = math.tanh %77 : vector<8x128xf32>
    %cst_31 = arith.constant 1.000000e+00 : f32
    %79 = vector.broadcast %cst_31 : f32 to vector<8x128xf32>
    %80 = arith.subf %79, %72 : vector<8x128xf32>
    %81 = arith.mulf %80, %78 : vector<8x128xf32>
    %82 = arith.mulf %72, %48 : vector<8x128xf32>
    %83 = arith.addf %81, %82 : vector<8x128xf32>
    %c1_32 = arith.constant 1 : index
    %c0_33 = arith.constant 0 : index
    %c0_34 = arith.constant 0 : index
    %84 = vector.load %arg12[%c1_32, %c0_33, %c0_34] : memref<8x8x128xf32, #tpu.memory_space<vmem>>, vector<1x8x128xf32>
    %85 = vector.shape_cast %84 : vector<1x8x128xf32> to vector<8x128xf32>
    %86 = vector.shape_cast %83 : vector<8x128xf32> to vector<1x8x128xf32>
    tpu.vector_store %arg12[%c1_32, %c0_33, %c0_34], %86 {strides = array<i32>} : memref<8x8x128xf32, #tpu.memory_space<vmem>>, vector<1x8x128xf32>,
    %c2 = arith.constant 2 : index
    %c0_35 = arith.constant 0 : index
    %c0_36 = arith.constant 0 : index
    %87 = vector.load %arg11[%c2, %c0_35, %c0_36] : memref<8x8x384xbf16, #tpu.memory_space<vmem>>, vector<1x8x384xbf16>
    %88 = vector.shape_cast %87 : vector<1x8x384xbf16> to vector<8x384xbf16>
    %89 = arith.extf %88 : vector<8x384xbf16> to vector<8x384xf32>
    %90 = arith.truncf %83 : vector<8x128xf32> to vector<8x128xbf16>
    %cst_37 = arith.constant dense<0.000000e+00> : vector<8x384xf32>
    %91 = tpu.matmul %90, %15, %cst_37 {dimension_numbers = #tpu.dot_dimension_numbers<[1], [0], [0], [1], [0, 0, 1, 1], [], []>} : vector<8x128xbf16>, vector<128x384xbf16>, vector<8x384xf32> -> vector<8x384xf32>
    %92 = vector.extract_strided_slice %89 {offsets = [0, 0], sizes = [8, 128], strides = [1, 1]} : vector<8x384xf32> to vector<8x128xf32>
    %93 = vector.extract_strided_slice %91 {offsets = [0, 0], sizes = [8, 128], strides = [1, 1]} : vector<8x384xf32> to vector<8x128xf32>
    %94 = arith.addf %92, %93 : vector<8x128xf32>
    %95 = arith.negf %94 : vector<8x128xf32>
    %96 = math.exp %95 : vector<8x128xf32>
    %cst_38 = arith.constant 1.000000e+00 : f32
    %97 = vector.broadcast %cst_38 : f32 to vector<8x128xf32>
    %98 = arith.addf %97, %96 : vector<8x128xf32>
    %99 = arith.divf %97, %98 : vector<8x128xf32>
    %100 = vector.extract_strided_slice %89 {offsets = [0, 128], sizes = [8, 128], strides = [1, 1]} : vector<8x384xf32> to vector<8x128xf32>
    %101 = vector.extract_strided_slice %91 {offsets = [0, 128], sizes = [8, 128], strides = [1, 1]} : vector<8x384xf32> to vector<8x128xf32>
    %102 = arith.addf %100, %101 : vector<8x128xf32>
    %103 = arith.negf %102 : vector<8x128xf32>
    %104 = math.exp %103 : vector<8x128xf32>
    %cst_39 = arith.constant 1.000000e+00 : f32
    %105 = vector.broadcast %cst_39 : f32 to vector<8x128xf32>
    %106 = arith.addf %105, %104 : vector<8x128xf32>
    %107 = arith.divf %105, %106 : vector<8x128xf32>
    %108 = vector.extract_strided_slice %89 {offsets = [0, 256], sizes = [8, 128], strides = [1, 1]} : vector<8x384xf32> to vector<8x128xf32>
    %109 = vector.extract_strided_slice %91 {offsets = [0, 256], sizes = [8, 128], strides = [1, 1]} : vector<8x384xf32> to vector<8x128xf32>
    %110 = arith.addf %109, %14 : vector<8x128xf32>
    %111 = arith.mulf %99, %110 : vector<8x128xf32>
    %112 = arith.addf %108, %111 : vector<8x128xf32>
    %113 = math.tanh %112 : vector<8x128xf32>
    %cst_40 = arith.constant 1.000000e+00 : f32
    %114 = vector.broadcast %cst_40 : f32 to vector<8x128xf32>
    %115 = arith.subf %114, %107 : vector<8x128xf32>
    %116 = arith.mulf %115, %113 : vector<8x128xf32>
    %117 = arith.mulf %107, %83 : vector<8x128xf32>
    %118 = arith.addf %116, %117 : vector<8x128xf32>
    %c2_41 = arith.constant 2 : index
    %c0_42 = arith.constant 0 : index
    %c0_43 = arith.constant 0 : index
    %119 = vector.load %arg12[%c2_41, %c0_42, %c0_43] : memref<8x8x128xf32, #tpu.memory_space<vmem>>, vector<1x8x128xf32>
    %120 = vector.shape_cast %119 : vector<1x8x128xf32> to vector<8x128xf32>
    %121 = vector.shape_cast %118 : vector<8x128xf32> to vector<1x8x128xf32>
    tpu.vector_store %arg12[%c2_41, %c0_42, %c0_43], %121 {strides = array<i32>} : memref<8x8x128xf32, #tpu.memory_space<vmem>>, vector<1x8x128xf32>,
    %c3 = arith.constant 3 : index
    %c0_44 = arith.constant 0 : index
    %c0_45 = arith.constant 0 : index
    %122 = vector.load %arg11[%c3, %c0_44, %c0_45] : memref<8x8x384xbf16, #tpu.memory_space<vmem>>, vector<1x8x384xbf16>
    %123 = vector.shape_cast %122 : vector<1x8x384xbf16> to vector<8x384xbf16>
    %124 = arith.extf %123 : vector<8x384xbf16> to vector<8x384xf32>
    %125 = arith.truncf %118 : vector<8x128xf32> to vector<8x128xbf16>
    %cst_46 = arith.constant dense<0.000000e+00> : vector<8x384xf32>
    %126 = tpu.matmul %125, %15, %cst_46 {dimension_numbers = #tpu.dot_dimension_numbers<[1], [0], [0], [1], [0, 0, 1, 1], [], []>} : vector<8x128xbf16>, vector<128x384xbf16>, vector<8x384xf32> -> vector<8x384xf32>
    %127 = vector.extract_strided_slice %124 {offsets = [0, 0], sizes = [8, 128], strides = [1, 1]} : vector<8x384xf32> to vector<8x128xf32>
    %128 = vector.extract_strided_slice %126 {offsets = [0, 0], sizes = [8, 128], strides = [1, 1]} : vector<8x384xf32> to vector<8x128xf32>
    %129 = arith.addf %127, %128 : vector<8x128xf32>
    %130 = arith.negf %129 : vector<8x128xf32>
    %131 = math.exp %130 : vector<8x128xf32>
    %cst_47 = arith.constant 1.000000e+00 : f32
    %132 = vector.broadcast %cst_47 : f32 to vector<8x128xf32>
    %133 = arith.addf %132, %131 : vector<8x128xf32>
    %134 = arith.divf %132, %133 : vector<8x128xf32>
    %135 = vector.extract_strided_slice %124 {offsets = [0, 128], sizes = [8, 128], strides = [1, 1]} : vector<8x384xf32> to vector<8x128xf32>
    %136 = vector.extract_strided_slice %126 {offsets = [0, 128], sizes = [8, 128], strides = [1, 1]} : vector<8x384xf32> to vector<8x128xf32>
    %137 = arith.addf %135, %136 : vector<8x128xf32>
    %138 = arith.negf %137 : vector<8x128xf32>
    %139 = math.exp %138 : vector<8x128xf32>
    %cst_48 = arith.constant 1.000000e+00 : f32
    %140 = vector.broadcast %cst_48 : f32 to vector<8x128xf32>
    %141 = arith.addf %140, %139 : vector<8x128xf32>
    %142 = arith.divf %140, %141 : vector<8x128xf32>
    %143 = vector.extract_strided_slice %124 {offsets = [0, 256], sizes = [8, 128], strides = [1, 1]} : vector<8x384xf32> to vector<8x128xf32>
    %144 = vector.extract_strided_slice %126 {offsets = [0, 256], sizes = [8, 128], strides = [1, 1]} : vector<8x384xf32> to vector<8x128xf32>
    %145 = arith.addf %144, %14 : vector<8x128xf32>
    %146 = arith.mulf %134, %145 : vector<8x128xf32>
    %147 = arith.addf %143, %146 : vector<8x128xf32>
    %148 = math.tanh %147 : vector<8x128xf32>
    %cst_49 = arith.constant 1.000000e+00 : f32
    %149 = vector.broadcast %cst_49 : f32 to vector<8x128xf32>
    %150 = arith.subf %149, %142 : vector<8x128xf32>
    %151 = arith.mulf %150, %148 : vector<8x128xf32>
    %152 = arith.mulf %142, %118 : vector<8x128xf32>
    %153 = arith.addf %151, %152 : vector<8x128xf32>
    %c3_50 = arith.constant 3 : index
    %c0_51 = arith.constant 0 : index
    %c0_52 = arith.constant 0 : index
    %154 = vector.load %arg12[%c3_50, %c0_51, %c0_52] : memref<8x8x128xf32, #tpu.memory_space<vmem>>, vector<1x8x128xf32>
    %155 = vector.shape_cast %154 : vector<1x8x128xf32> to vector<8x128xf32>
    %156 = vector.shape_cast %153 : vector<8x128xf32> to vector<1x8x128xf32>
    tpu.vector_store %arg12[%c3_50, %c0_51, %c0_52], %156 {strides = array<i32>} : memref<8x8x128xf32, #tpu.memory_space<vmem>>, vector<1x8x128xf32>,
    %c4 = arith.constant 4 : index
    %c0_53 = arith.constant 0 : index
    %c0_54 = arith.constant 0 : index
    %157 = vector.load %arg11[%c4, %c0_53, %c0_54] : memref<8x8x384xbf16, #tpu.memory_space<vmem>>, vector<1x8x384xbf16>
    %158 = vector.shape_cast %157 : vector<1x8x384xbf16> to vector<8x384xbf16>
    %159 = arith.extf %158 : vector<8x384xbf16> to vector<8x384xf32>
    %160 = arith.truncf %153 : vector<8x128xf32> to vector<8x128xbf16>
    %cst_55 = arith.constant dense<0.000000e+00> : vector<8x384xf32>
    %161 = tpu.matmul %160, %15, %cst_55 {dimension_numbers = #tpu.dot_dimension_numbers<[1], [0], [0], [1], [0, 0, 1, 1], [], []>} : vector<8x128xbf16>, vector<128x384xbf16>, vector<8x384xf32> -> vector<8x384xf32>
    %162 = vector.extract_strided_slice %159 {offsets = [0, 0], sizes = [8, 128], strides = [1, 1]} : vector<8x384xf32> to vector<8x128xf32>
    %163 = vector.extract_strided_slice %161 {offsets = [0, 0], sizes = [8, 128], strides = [1, 1]} : vector<8x384xf32> to vector<8x128xf32>
    %164 = arith.addf %162, %163 : vector<8x128xf32>
    %165 = arith.negf %164 : vector<8x128xf32>
    %166 = math.exp %165 : vector<8x128xf32>
    %cst_56 = arith.constant 1.000000e+00 : f32
    %167 = vector.broadcast %cst_56 : f32 to vector<8x128xf32>
    %168 = arith.addf %167, %166 : vector<8x128xf32>
    %169 = arith.divf %167, %168 : vector<8x128xf32>
    %170 = vector.extract_strided_slice %159 {offsets = [0, 128], sizes = [8, 128], strides = [1, 1]} : vector<8x384xf32> to vector<8x128xf32>
    %171 = vector.extract_strided_slice %161 {offsets = [0, 128], sizes = [8, 128], strides = [1, 1]} : vector<8x384xf32> to vector<8x128xf32>
    %172 = arith.addf %170, %171 : vector<8x128xf32>
    %173 = arith.negf %172 : vector<8x128xf32>
    %174 = math.exp %173 : vector<8x128xf32>
    %cst_57 = arith.constant 1.000000e+00 : f32
    %175 = vector.broadcast %cst_57 : f32 to vector<8x128xf32>
    %176 = arith.addf %175, %174 : vector<8x128xf32>
    %177 = arith.divf %175, %176 : vector<8x128xf32>
    %178 = vector.extract_strided_slice %159 {offsets = [0, 256], sizes = [8, 128], strides = [1, 1]} : vector<8x384xf32> to vector<8x128xf32>
    %179 = vector.extract_strided_slice %161 {offsets = [0, 256], sizes = [8, 128], strides = [1, 1]} : vector<8x384xf32> to vector<8x128xf32>
    %180 = arith.addf %179, %14 : vector<8x128xf32>
    %181 = arith.mulf %169, %180 : vector<8x128xf32>
    %182 = arith.addf %178, %181 : vector<8x128xf32>
    %183 = math.tanh %182 : vector<8x128xf32>
    %cst_58 = arith.constant 1.000000e+00 : f32
    %184 = vector.broadcast %cst_58 : f32 to vector<8x128xf32>
    %185 = arith.subf %184, %177 : vector<8x128xf32>
    %186 = arith.mulf %185, %183 : vector<8x128xf32>
    %187 = arith.mulf %177, %153 : vector<8x128xf32>
    %188 = arith.addf %186, %187 : vector<8x128xf32>
    %c4_59 = arith.constant 4 : index
    %c0_60 = arith.constant 0 : index
    %c0_61 = arith.constant 0 : index
    %189 = vector.load %arg12[%c4_59, %c0_60, %c0_61] : memref<8x8x128xf32, #tpu.memory_space<vmem>>, vector<1x8x128xf32>
    %190 = vector.shape_cast %189 : vector<1x8x128xf32> to vector<8x128xf32>
    %191 = vector.shape_cast %188 : vector<8x128xf32> to vector<1x8x128xf32>
    tpu.vector_store %arg12[%c4_59, %c0_60, %c0_61], %191 {strides = array<i32>} : memref<8x8x128xf32, #tpu.memory_space<vmem>>, vector<1x8x128xf32>,
    %c5 = arith.constant 5 : index
    %c0_62 = arith.constant 0 : index
    %c0_63 = arith.constant 0 : index
    %192 = vector.load %arg11[%c5, %c0_62, %c0_63] : memref<8x8x384xbf16, #tpu.memory_space<vmem>>, vector<1x8x384xbf16>
    %193 = vector.shape_cast %192 : vector<1x8x384xbf16> to vector<8x384xbf16>
    %194 = arith.extf %193 : vector<8x384xbf16> to vector<8x384xf32>
    %195 = arith.truncf %188 : vector<8x128xf32> to vector<8x128xbf16>
    %cst_64 = arith.constant dense<0.000000e+00> : vector<8x384xf32>
    %196 = tpu.matmul %195, %15, %cst_64 {dimension_numbers = #tpu.dot_dimension_numbers<[1], [0], [0], [1], [0, 0, 1, 1], [], []>} : vector<8x128xbf16>, vector<128x384xbf16>, vector<8x384xf32> -> vector<8x384xf32>
    %197 = vector.extract_strided_slice %194 {offsets = [0, 0], sizes = [8, 128], strides = [1, 1]} : vector<8x384xf32> to vector<8x128xf32>
    %198 = vector.extract_strided_slice %196 {offsets = [0, 0], sizes = [8, 128], strides = [1, 1]} : vector<8x384xf32> to vector<8x128xf32>
    %199 = arith.addf %197, %198 : vector<8x128xf32>
    %200 = arith.negf %199 : vector<8x128xf32>
    %201 = math.exp %200 : vector<8x128xf32>
    %cst_65 = arith.constant 1.000000e+00 : f32
    %202 = vector.broadcast %cst_65 : f32 to vector<8x128xf32>
    %203 = arith.addf %202, %201 : vector<8x128xf32>
    %204 = arith.divf %202, %203 : vector<8x128xf32>
    %205 = vector.extract_strided_slice %194 {offsets = [0, 128], sizes = [8, 128], strides = [1, 1]} : vector<8x384xf32> to vector<8x128xf32>
    %206 = vector.extract_strided_slice %196 {offsets = [0, 128], sizes = [8, 128], strides = [1, 1]} : vector<8x384xf32> to vector<8x128xf32>
    %207 = arith.addf %205, %206 : vector<8x128xf32>
    %208 = arith.negf %207 : vector<8x128xf32>
    %209 = math.exp %208 : vector<8x128xf32>
    %cst_66 = arith.constant 1.000000e+00 : f32
    %210 = vector.broadcast %cst_66 : f32 to vector<8x128xf32>
    %211 = arith.addf %210, %209 : vector<8x128xf32>
    %212 = arith.divf %210, %211 : vector<8x128xf32>
    %213 = vector.extract_strided_slice %194 {offsets = [0, 256], sizes = [8, 128], strides = [1, 1]} : vector<8x384xf32> to vector<8x128xf32>
    %214 = vector.extract_strided_slice %196 {offsets = [0, 256], sizes = [8, 128], strides = [1, 1]} : vector<8x384xf32> to vector<8x128xf32>
    %215 = arith.addf %214, %14 : vector<8x128xf32>
    %216 = arith.mulf %204, %215 : vector<8x128xf32>
    %217 = arith.addf %213, %216 : vector<8x128xf32>
    %218 = math.tanh %217 : vector<8x128xf32>
    %cst_67 = arith.constant 1.000000e+00 : f32
    %219 = vector.broadcast %cst_67 : f32 to vector<8x128xf32>
    %220 = arith.subf %219, %212 : vector<8x128xf32>
    %221 = arith.mulf %220, %218 : vector<8x128xf32>
    %222 = arith.mulf %212, %188 : vector<8x128xf32>
    %223 = arith.addf %221, %222 : vector<8x128xf32>
    %c5_68 = arith.constant 5 : index
    %c0_69 = arith.constant 0 : index
    %c0_70 = arith.constant 0 : index
    %224 = vector.load %arg12[%c5_68, %c0_69, %c0_70] : memref<8x8x128xf32, #tpu.memory_space<vmem>>, vector<1x8x128xf32>
    %225 = vector.shape_cast %224 : vector<1x8x128xf32> to vector<8x128xf32>
    %226 = vector.shape_cast %223 : vector<8x128xf32> to vector<1x8x128xf32>
    tpu.vector_store %arg12[%c5_68, %c0_69, %c0_70], %226 {strides = array<i32>} : memref<8x8x128xf32, #tpu.memory_space<vmem>>, vector<1x8x128xf32>,
    %c6 = arith.constant 6 : index
    %c0_71 = arith.constant 0 : index
    %c0_72 = arith.constant 0 : index
    %227 = vector.load %arg11[%c6, %c0_71, %c0_72] : memref<8x8x384xbf16, #tpu.memory_space<vmem>>, vector<1x8x384xbf16>
    %228 = vector.shape_cast %227 : vector<1x8x384xbf16> to vector<8x384xbf16>
    %229 = arith.extf %228 : vector<8x384xbf16> to vector<8x384xf32>
    %230 = arith.truncf %223 : vector<8x128xf32> to vector<8x128xbf16>
    %cst_73 = arith.constant dense<0.000000e+00> : vector<8x384xf32>
    %231 = tpu.matmul %230, %15, %cst_73 {dimension_numbers = #tpu.dot_dimension_numbers<[1], [0], [0], [1], [0, 0, 1, 1], [], []>} : vector<8x128xbf16>, vector<128x384xbf16>, vector<8x384xf32> -> vector<8x384xf32>
    %232 = vector.extract_strided_slice %229 {offsets = [0, 0], sizes = [8, 128], strides = [1, 1]} : vector<8x384xf32> to vector<8x128xf32>
    %233 = vector.extract_strided_slice %231 {offsets = [0, 0], sizes = [8, 128], strides = [1, 1]} : vector<8x384xf32> to vector<8x128xf32>
    %234 = arith.addf %232, %233 : vector<8x128xf32>
    %235 = arith.negf %234 : vector<8x128xf32>
    %236 = math.exp %235 : vector<8x128xf32>
    %cst_74 = arith.constant 1.000000e+00 : f32
    %237 = vector.broadcast %cst_74 : f32 to vector<8x128xf32>
    %238 = arith.addf %237, %236 : vector<8x128xf32>
    %239 = arith.divf %237, %238 : vector<8x128xf32>
    %240 = vector.extract_strided_slice %229 {offsets = [0, 128], sizes = [8, 128], strides = [1, 1]} : vector<8x384xf32> to vector<8x128xf32>
    %241 = vector.extract_strided_slice %231 {offsets = [0, 128], sizes = [8, 128], strides = [1, 1]} : vector<8x384xf32> to vector<8x128xf32>
    %242 = arith.addf %240, %241 : vector<8x128xf32>
    %243 = arith.negf %242 : vector<8x128xf32>
    %244 = math.exp %243 : vector<8x128xf32>
    %cst_75 = arith.constant 1.000000e+00 : f32
    %245 = vector.broadcast %cst_75 : f32 to vector<8x128xf32>
    %246 = arith.addf %245, %244 : vector<8x128xf32>
    %247 = arith.divf %245, %246 : vector<8x128xf32>
    %248 = vector.extract_strided_slice %229 {offsets = [0, 256], sizes = [8, 128], strides = [1, 1]} : vector<8x384xf32> to vector<8x128xf32>
    %249 = vector.extract_strided_slice %231 {offsets = [0, 256], sizes = [8, 128], strides = [1, 1]} : vector<8x384xf32> to vector<8x128xf32>
    %250 = arith.addf %249, %14 : vector<8x128xf32>
    %251 = arith.mulf %239, %250 : vector<8x128xf32>
    %252 = arith.addf %248, %251 : vector<8x128xf32>
    %253 = math.tanh %252 : vector<8x128xf32>
    %cst_76 = arith.constant 1.000000e+00 : f32
    %254 = vector.broadcast %cst_76 : f32 to vector<8x128xf32>
    %255 = arith.subf %254, %247 : vector<8x128xf32>
    %256 = arith.mulf %255, %253 : vector<8x128xf32>
    %257 = arith.mulf %247, %223 : vector<8x128xf32>
    %258 = arith.addf %256, %257 : vector<8x128xf32>
    %c6_77 = arith.constant 6 : index
    %c0_78 = arith.constant 0 : index
    %c0_79 = arith.constant 0 : index
    %259 = vector.load %arg12[%c6_77, %c0_78, %c0_79] : memref<8x8x128xf32, #tpu.memory_space<vmem>>, vector<1x8x128xf32>
    %260 = vector.shape_cast %259 : vector<1x8x128xf32> to vector<8x128xf32>
    %261 = vector.shape_cast %258 : vector<8x128xf32> to vector<1x8x128xf32>
    tpu.vector_store %arg12[%c6_77, %c0_78, %c0_79], %261 {strides = array<i32>} : memref<8x8x128xf32, #tpu.memory_space<vmem>>, vector<1x8x128xf32>,
    %c7 = arith.constant 7 : index
    %c0_80 = arith.constant 0 : index
    %c0_81 = arith.constant 0 : index
    %262 = vector.load %arg11[%c7, %c0_80, %c0_81] : memref<8x8x384xbf16, #tpu.memory_space<vmem>>, vector<1x8x384xbf16>
    %263 = vector.shape_cast %262 : vector<1x8x384xbf16> to vector<8x384xbf16>
    %264 = arith.extf %263 : vector<8x384xbf16> to vector<8x384xf32>
    %265 = arith.truncf %258 : vector<8x128xf32> to vector<8x128xbf16>
    %cst_82 = arith.constant dense<0.000000e+00> : vector<8x384xf32>
    %266 = tpu.matmul %265, %15, %cst_82 {dimension_numbers = #tpu.dot_dimension_numbers<[1], [0], [0], [1], [0, 0, 1, 1], [], []>} : vector<8x128xbf16>, vector<128x384xbf16>, vector<8x384xf32> -> vector<8x384xf32>
    %267 = vector.extract_strided_slice %264 {offsets = [0, 0], sizes = [8, 128], strides = [1, 1]} : vector<8x384xf32> to vector<8x128xf32>
    %268 = vector.extract_strided_slice %266 {offsets = [0, 0], sizes = [8, 128], strides = [1, 1]} : vector<8x384xf32> to vector<8x128xf32>
    %269 = arith.addf %267, %268 : vector<8x128xf32>
    %270 = arith.negf %269 : vector<8x128xf32>
    %271 = math.exp %270 : vector<8x128xf32>
    %cst_83 = arith.constant 1.000000e+00 : f32
    %272 = vector.broadcast %cst_83 : f32 to vector<8x128xf32>
    %273 = arith.addf %272, %271 : vector<8x128xf32>
    %274 = arith.divf %272, %273 : vector<8x128xf32>
    %275 = vector.extract_strided_slice %264 {offsets = [0, 128], sizes = [8, 128], strides = [1, 1]} : vector<8x384xf32> to vector<8x128xf32>
    %276 = vector.extract_strided_slice %266 {offsets = [0, 128], sizes = [8, 128], strides = [1, 1]} : vector<8x384xf32> to vector<8x128xf32>
    %277 = arith.addf %275, %276 : vector<8x128xf32>
    %278 = arith.negf %277 : vector<8x128xf32>
    %279 = math.exp %278 : vector<8x128xf32>
    %cst_84 = arith.constant 1.000000e+00 : f32
    %280 = vector.broadcast %cst_84 : f32 to vector<8x128xf32>
    %281 = arith.addf %280, %279 : vector<8x128xf32>
    %282 = arith.divf %280, %281 : vector<8x128xf32>
    %283 = vector.extract_strided_slice %264 {offsets = [0, 256], sizes = [8, 128], strides = [1, 1]} : vector<8x384xf32> to vector<8x128xf32>
    %284 = vector.extract_strided_slice %266 {offsets = [0, 256], sizes = [8, 128], strides = [1, 1]} : vector<8x384xf32> to vector<8x128xf32>
    %285 = arith.addf %284, %14 : vector<8x128xf32>
    %286 = arith.mulf %274, %285 : vector<8x128xf32>
    %287 = arith.addf %283, %286 : vector<8x128xf32>
    %288 = math.tanh %287 : vector<8x128xf32>
    %cst_85 = arith.constant 1.000000e+00 : f32
    %289 = vector.broadcast %cst_85 : f32 to vector<8x128xf32>
    %290 = arith.subf %289, %282 : vector<8x128xf32>
    %291 = arith.mulf %290, %288 : vector<8x128xf32>
    %292 = arith.mulf %282, %258 : vector<8x128xf32>
    %293 = arith.addf %291, %292 : vector<8x128xf32>
    %c7_86 = arith.constant 7 : index
    %c0_87 = arith.constant 0 : index
    %c0_88 = arith.constant 0 : index
    %294 = vector.load %arg12[%c7_86, %c0_87, %c0_88] : memref<8x8x128xf32, #tpu.memory_space<vmem>>, vector<1x8x128xf32>
    %295 = vector.shape_cast %294 : vector<1x8x128xf32> to vector<8x128xf32>
    %296 = vector.shape_cast %293 : vector<8x128xf32> to vector<1x8x128xf32>
    tpu.vector_store %arg12[%c7_86, %c0_87, %c0_88], %296 {strides = array<i32>} : memref<8x8x128xf32, #tpu.memory_space<vmem>>, vector<1x8x128xf32>,
    %c0_89 = arith.constant 0 : index
    %c0_90 = arith.constant 0 : index
    %297 = vector.load %arg10[%c0_89, %c0_90] : memref<8x128xf32, #tpu.memory_space<vmem>>, vector<8x128xf32>
    tpu.vector_store %arg10[%c0_89, %c0_90], %293 {strides = array<i32>} : memref<8x128xf32, #tpu.memory_space<vmem>>, vector<8x128xf32>,
    %c0_91 = arith.constant 0 : index
    %c0_92 = arith.constant 0 : index
    %c0_93 = arith.constant 0 : index
    %298 = vector.load %arg12[%c0_91, %c0_92, %c0_93] : memref<8x8x128xf32, #tpu.memory_space<vmem>>, vector<8x8x128xf32>
    %299 = tpu.transpose %298, [1, 0, 2] : vector<8x8x128xf32> -> vector<8x8x128xf32>
    %300 = vector.shape_cast %299 : vector<8x8x128xf32> to vector<64x128xf32>
    tpu.wait_dma2 semaphore(%arg14 : memref<!tpu.dma_semaphore, #tpu.memory_space<semaphore_mem>>) src(%arg7 : memref<128x128xbf16, #tpu.memory_space<any>>) dst(%arg13 : memref<128x128xbf16, #tpu.memory_space<vmem>>)
    %301 = arith.truncf %300 : vector<64x128xf32> to vector<64x128xbf16>
    %c0_94 = arith.constant 0 : index
    %c0_95 = arith.constant 0 : index
    %302 = vector.load %arg13[%c0_94, %c0_95] : memref<128x128xbf16, #tpu.memory_space<vmem>>, vector<128x128xbf16>
    %cst_96 = arith.constant dense<0.000000e+00> : vector<64x128xf32>
    %303 = tpu.matmul %301, %302, %cst_96 {dimension_numbers = #tpu.dot_dimension_numbers<[1], [0], [0], [1], [0, 0, 1, 1], [], []>} : vector<64x128xbf16>, vector<128x128xbf16>, vector<64x128xf32> -> vector<64x128xf32>
    %c0_97 = arith.constant 0 : index
    %c0_98 = arith.constant 0 : index
    %304 = vector.load %arg8[%c0_97, %c0_98] : memref<1x128xf32, #tpu.memory_space<vmem>>, vector<1x128xf32>
    %305 = vector.broadcast %304 : vector<1x128xf32> to vector<64x128xf32>
    %306 = arith.addf %303, %305 : vector<64x128xf32>
    %cst_99 = arith.constant dense<0xFF800000> : vector<64xf32>
    %307 = vector.multi_reduction <maximumf>, %306, %cst_99 [1] : vector<64x128xf32> to vector<64xf32>
    %308 = vector.shape_cast %307 : vector<64xf32> to vector<64x1xf32>
    %309 = vector.broadcast %308 : vector<64x1xf32> to vector<64x128xf32>
    %310 = arith.subf %306, %309 : vector<64x128xf32>
    %311 = math.exp %310 : vector<64x128xf32>
    %cst_100 = arith.constant dense<0.000000e+00> : vector<64xf32>
    %312 = vector.multi_reduction <add>, %311, %cst_100 [1] : vector<64x128xf32> to vector<64xf32>
    %313 = vector.shape_cast %312 : vector<64xf32> to vector<64x1xf32>
    %314 = math.log %313 : vector<64x1xf32>
    %315 = vector.broadcast %308 : vector<64x1xf32> to vector<64x128xf32>
    %316 = arith.subf %306, %315 : vector<64x128xf32>
    %317 = vector.broadcast %314 : vector<64x1xf32> to vector<64x128xf32>
    %318 = arith.subf %316, %317 : vector<64x128xf32>
    %319 = vector.shape_cast %318 : vector<64x128xf32> to vector<8x8x128xf32>
    %c0_101 = arith.constant 0 : index
    %c0_102 = arith.constant 0 : index
    %c0_103 = arith.constant 0 : index
    %320 = vector.load %arg9[%c0_101, %c0_102, %c0_103] : memref<8x8x128xf32, #tpu.memory_space<vmem>>, vector<8x8x128xf32>
    tpu.vector_store %arg9[%c0_101, %c0_102, %c0_103], %319 {strides = array<i32>} : memref<8x8x128xf32, #tpu.memory_space<vmem>>, vector<8x8x128xf32>,
    return
  }
  func.func @transform_0(%arg0: i32) -> (i32, i32, i32) {
    %c0_i32 = arith.constant 0 : i32
    %c0_i32_0 = arith.constant 0 : i32
    %c0_i32_1 = arith.constant 0 : i32
    %c0_i32_2 = arith.constant 0 : i32
    return %c0_i32, %c0_i32_0, %c0_i32_1 : i32, i32, i32
  }
  func.func @transform_1(%arg0: i32) -> (i32, i32) {
    %c0_i32 = arith.constant 0 : i32
    %c0_i32_0 = arith.constant 0 : i32
    %c0_i32_1 = arith.constant 0 : i32
    return %c0_i32, %c0_i32_0 : i32, i32
  }
  func.func @transform_2(%arg0: i32) -> (i32, i32) {
    %c0_i32 = arith.constant 0 : i32
    %c0_i32_0 = arith.constant 0 : i32
    %c0_i32_1 = arith.constant 0 : i32
    return %c0_i32, %c0_i32_0 : i32, i32
  }
  func.func @transform_3(%arg0: i32) -> (i32, i32) {
    %c0_i32 = arith.constant 0 : i32
    %c0_i32_0 = arith.constant 0 : i32
    %c0_i32_1 = arith.constant 0 : i32
    return %c0_i32, %c0_i32_0 : i32, i32
  }
  func.func @transform_4(%arg0: i32) -> (i32, i32) {
    %c0_i32 = arith.constant 0 : i32
    %c0_i32_0 = arith.constant 0 : i32
    %c0_i32_1 = arith.constant 0 : i32
    return %c0_i32, %c0_i32_0 : i32, i32
  }
  func.func @transform_5(%arg0: i32) -> (i32, i32) {
    %c0_i32 = arith.constant 0 : i32
    %c0_i32_0 = arith.constant 0 : i32
    %c0_i32_1 = arith.constant 0 : i32
    return %c0_i32, %c0_i32_0 : i32, i32
  }
  func.func @transform_7(%arg0: i32) -> (i32, i32) {
    %c0_i32 = arith.constant 0 : i32
    %c0_i32_0 = arith.constant 0 : i32
    %c0_i32_1 = arith.constant 0 : i32
    return %c0_i32, %c0_i32_0 : i32, i32
  }
  func.func @transform_8(%arg0: i32) -> (i32, i32, i32) {
    %c0_i32 = arith.constant 0 : i32
    %c0_i32_0 = arith.constant 0 : i32
    %c0_i32_1 = arith.constant 0 : i32
    %c0_i32_2 = arith.constant 0 : i32
    return %c0_i32, %c0_i32_0, %c0_i32_1 : i32, i32, i32
  }
  func.func @transform_9(%arg0: i32) -> (i32, i32) {
    %c0_i32 = arith.constant 0 : i32
    %c0_i32_0 = arith.constant 0 : i32
    %c0_i32_1 = arith.constant 0 : i32
    return %c0_i32, %c0_i32_0 : i32, i32
  }
}

</mosaic_0001>

<llo_original>
// kernel: tpu_custom_call.1
$region0: #{tpu_custom_call.1}
  #allocation0 [shape = 'u32[]', space=smem, size = 0x4, offset = 0x4, fixed_abs, tag = 'smem constant byte address 0x4 - core index']
  #allocation1 [shape = 'u32[144,128]{1,0:T(1,128)}', space=vmem, size = 0x12000, scoped, tag = 'internal scratch']
  #allocation2 [shape = 'bf16[8,8,384]{2,1,0:T(8,128)(2,1)}', space=vmem, size = 0xc000, scoped, tag = 'scratch operand']
  #allocation3 [shape = 'f32[8,8,128]{2,1,0:T(8,128)}', space=vmem, size = 0x8000, scoped, tag = 'scratch operand']
  #allocation4 [shape = 'bf16[128,128]{1,0:T(16,128)(2,1)}', space=vmem, size = 0x8000, scoped, tag = 'scratch operand']
  #allocation5 [shape = 's32[1]{0}', space=sflag, size = 0x4, scoped, tag = 'scratch operand']
  #allocation17 [shape = 's32[]', space=sflag, size = 0x4, offset = 0, fixed_abs, tag = 'sflag constant byte address 0x0 - dummy sync flag']
  #allocation18 [shape = 's32[]', space=sflag, size = 0x4, offset = 0, fixed_abs, tag = 'sflag constant byte address 0x0 - dummy sync flag']
  #allocation19 [shape = 'u32[]', space=smem, size = 0x4, offset = 0x44, fixed_abs, tag = 'smem constant byte address 0x44 - assertion arg 0']
  #allocation20 [shape = 'u32[]', space=smem, size = 0x4, offset = 0x48, fixed_abs, tag = 'smem constant byte address 0x48 - assertion arg 1']
  %s0 = inlined_call_operand.hbm [shape: bf16[8,8,128], index: 0, kind: input, shape index: {}]
  %s1 = inlined_call_operand.hbm [shape: f32[8,128], index: 1, kind: input, shape index: {}]
  %s2 = inlined_call_operand.hbm [shape: bf16[128,384], index: 2, kind: input, shape index: {}]
  %s3 = inlined_call_operand.hbm [shape: bf16[128,384], index: 3, kind: input, shape index: {}]
  %s4 = inlined_call_operand.vmem [shape: f32[1,384], index: 4, kind: input, shape index: {}]
  %s5 = inlined_call_operand.vmem [shape: f32[1,128], index: 5, kind: input, shape index: {}]
  %s6 = inlined_call_operand.hbm [shape: bf16[128,128], index: 6, kind: input, shape index: {}]
  %s7 = inlined_call_operand.vmem [shape: f32[1,128], index: 7, kind: input, shape index: {}]
  %s8 = inlined_call_operand.hbm [shape: f32[8,8,128], index: 8, kind: output, shape index: {0}]
  %s9 = inlined_call_operand.hbm [shape: f32[8,128], index: 9, kind: output, shape index: {1}]
  %10 = xla_tuple %s8, %s9
  %s11 = sld [smem:[#allocation0]]
  $region66: #{tpu_custom_call.1} parent=0
    _
  %s13 = ssub.s32 1, %s11
  %s14 = scalar_select 0, %s13, %s11
  $region1: #{tpu_custom_call.1} parent=0
    #allocation6 [shape = 'u8[16384]{0}', space=vmem, size = 0x4000, scoped, tag = 'input window, operand 0, single buffered']
    #allocation7 [shape = 's32[1]{0}', space=sflag, size = 0x4, scoped, tag = 'scoped memory for tpu_custom_call.1']
    #allocation8 [shape = 's32[1]{0}', space=sflag, size = 0x4, scoped, tag = 'scoped memory for tpu_custom_call.1']
    #allocation9 [shape = 'u8[4096]{0}', space=vmem, size = 0x1000, scoped, tag = 'input window, operand 1, single buffered']
    #allocation10 [shape = 's32[1]{0}', space=sflag, size = 0x4, scoped, tag = 'scoped memory for tpu_custom_call.1']
    #allocation11 [shape = 'u8[98304]{0}', space=vmem, size = 0x18000, scoped, tag = 'input window, operand 2, single buffered']
    #allocation12 [shape = 'u8[98304]{0}', space=vmem, size = 0x18000, scoped, tag = 'input window, operand 3, single buffered']
    #allocation13 [shape = 's32[1]{0}', space=sflag, size = 0x4, scoped, tag = 'scoped memory for tpu_custom_call.1']
    #allocation14 [shape = 'u8[32768]{0}', space=vmem, size = 0x8000, scoped, tag = 'output window, operand 0, single buffered']
    #allocation15 [shape = 'u8[4096]{0}', space=vmem, size = 0x1000, scoped, tag = 'output window, operand 1, single buffered']
    #allocation16 [shape = 's32[1]{0}', space=sflag, size = 0x4, scoped, tag = 'scoped memory for tpu_custom_call.1']
    %15 = vsyncpa [#allocation7], 0
    %16 = vsyncpa [#allocation10], 0
    %17 = vsyncpa [#allocation13], 0
    %18 = vsyncpa [#allocation8], 0
    %19 = vsyncpa [#allocation16], 0
    // Predicated region
    $region2: #{tpu_custom_call.1} parent=1 // pred_check
      _
    $region3: #{tpu_custom_call.1} parent=1 // pred_check_branch
      %21 = sbr.rel (0) target = $region5
    $region4: #{tpu_custom_call.1} parent=1 // pred_region
      %s23 = ssub.s32 512, 512
      %24 = vsyncadd [#allocation7], %s23
      %s25 = sshll.u32 [#allocation6], 4
      %s26 = int_to_ptr.vmem [resolvable:$true] %s25
      %31 = dma.hbm_to_vmem [thread:$0]  %s0, 512, %s26, [#allocation7], 64, 64, 4
    $region5: #{tpu_custom_call.1} parent=1 // pred_fallthru
      _
    // Predicated region
    $region6: #{tpu_custom_call.1} parent=1 // pred_check
      _
    $region7: #{tpu_custom_call.1} parent=1 // pred_check_branch
      %33 = sbr.rel (0) target = $region9
    $region8: #{tpu_custom_call.1} parent=1 // pred_region
      %s35 = ssub.s32 128, 128
      %36 = vsyncadd [#allocation10], %s35
      %s38 = sshll.u32 [#allocation9], 4
      %s39 = int_to_ptr.vmem [resolvable:$true] %s38
      %41 = dma.hbm_to_vmem [thread:$0]  %s1, 128, %s39, [#allocation10]
    $region9: #{tpu_custom_call.1} parent=1 // pred_fallthru
      _
    // Predicated region
    $region10: #{tpu_custom_call.1} parent=1 // pred_check
      _
    $region11: #{tpu_custom_call.1} parent=1 // pred_check_branch
      %43 = sbr.rel (0) target = $region13
    $region12: #{tpu_custom_call.1} parent=1 // pred_region
      %s45 = ssub.s32 3072, 3072
      %46 = vsyncadd [#allocation10], %s45
      %s47 = sshll.u32 [#allocation11], 4
      %s48 = int_to_ptr.vmem [resolvable:$true] %s47
      %53 = dma.hbm_to_vmem [thread:$0]  %s2, 3072, %s48, [#allocation10], 192, 192, 12
    $region13: #{tpu_custom_call.1} parent=1 // pred_fallthru
      _
    // Predicated region
    $region14: #{tpu_custom_call.1} parent=1 // pred_check
      _
    $region15: #{tpu_custom_call.1} parent=1 // pred_check_branch
      %55 = sbr.rel (0) target = $region17
    $region16: #{tpu_custom_call.1} parent=1 // pred_region
      %s57 = ssub.s32 3072, 3072
      %58 = vsyncadd [#allocation13], %s57
      %s59 = sshll.u32 [#allocation12], 4
      %s60 = int_to_ptr.vmem [resolvable:$true] %s59
      %65 = dma.hbm_to_vmem [thread:$0]  %s3, 3072, %s60, [#allocation13], 192, 192, 12
    $region17: #{tpu_custom_call.1} parent=1 // pred_fallthru
      _
    // Predicated region
    $region18: #{tpu_custom_call.1} parent=1 // pred_check
      _
    $region19: #{tpu_custom_call.1} parent=1 // pred_check_branch
      %67 = sbr.rel (0) target = $region21
    $region20: #{tpu_custom_call.1} parent=1 // pred_region
      _
    $region21: #{tpu_custom_call.1} parent=1 // pred_fallthru
      _
    // Predicated region
    $region22: #{tpu_custom_call.1} parent=1 // pred_check
      _
    $region23: #{tpu_custom_call.1} parent=1 // pred_check_branch
      %69 = sbr.rel (0) target = $region25
    $region24: #{tpu_custom_call.1} parent=1 // pred_region
      _
    $region25: #{tpu_custom_call.1} parent=1 // pred_fallthru
      _
    // Predicated region
    $region26: #{tpu_custom_call.1} parent=1 // pred_check
      _
    $region27: #{tpu_custom_call.1} parent=1 // pred_check_branch
      %71 = sbr.rel (0) target = $region29
    $region28: #{tpu_custom_call.1} parent=1 // pred_region
      _
    $region29: #{tpu_custom_call.1} parent=1 // pred_fallthru
      _
    // Predicated region
    $region30: #{tpu_custom_call.1} parent=1 // pred_check
      _
    $region31: #{tpu_custom_call.1} parent=1 // pred_check_branch
      %73 = sbr.rel (0) target = $region33
    $region32: #{tpu_custom_call.1} parent=1 // pred_region
      %74 = dma.done [#allocation7], 512
    $region33: #{tpu_custom_call.1} parent=1 // pred_fallthru
      _
    // Predicated region
    $region34: #{tpu_custom_call.1} parent=1 // pred_check
      _
    $region35: #{tpu_custom_call.1} parent=1 // pred_check_branch
      %76 = sbr.rel (0) target = $region37
    $region36: #{tpu_custom_call.1} parent=1 // pred_region
      %77 = dma.done [#allocation10], 128
    $region37: #{tpu_custom_call.1} parent=1 // pred_fallthru
      _
    // Predicated region
    $region38: #{tpu_custom_call.1} parent=1 // pred_check
      _
    $region39: #{tpu_custom_call.1} parent=1 // pred_check_branch
      %79 = sbr.rel (0) target = $region41
    $region40: #{tpu_custom_call.1} parent=1 // pred_region
      %80 = dma.done [#allocation10], 3072
    $region41: #{tpu_custom_call.1} parent=1 // pred_fallthru
      _
    // Predicated region
    $region42: #{tpu_custom_call.1} parent=1 // pred_check
      _
    $region43: #{tpu_custom_call.1} parent=1 // pred_check_branch
      %82 = sbr.rel (0) target = $region45
    $region44: #{tpu_custom_call.1} parent=1 // pred_region
      %83 = dma.done [#allocation13], 3072
    $region45: #{tpu_custom_call.1} parent=1 // pred_fallthru
      _
    // Predicated region
    $region46: #{tpu_custom_call.1} parent=1 // pred_check
      _
    $region47: #{tpu_custom_call.1} parent=1 // pred_check_branch
      %86 = sbr.rel target = $region49
    $region48: #{tpu_custom_call.1} parent=1 // pred_region
      %87 = sst [smem:[#allocation19]] [#allocation18]
      %88 = sst [smem:[#allocation20]] [#allocation17]
    $region49: #{tpu_custom_call.1} parent=1 // pred_fallthru
      _
    %90 = shalt.err (0)
    %s92 = sshll.u32 [#allocation4], 4
    %s93 = int_to_ptr.vmem [resolvable:$true] %s92
    %95 = dma.hbm_to_vmem [thread:$0]  %s6, 1024, %s93, [#allocation5]
    %v96 = vld [vmem:[#allocation6] sm:$0xf]
    %v97 = vld [vmem:[#allocation6 + $0x4] sm:$0xf]
    %v98 = vld [vmem:[#allocation6 + $0x8] sm:$0xf]
    %v99 = vld [vmem:[#allocation6 + $0xc] sm:$0xf]
    %v100 = vld [vmem:[#allocation6 + $0x10] sm:$0xf]
    %v101 = vld [vmem:[#allocation6 + $0x14] sm:$0xf]
    %v102 = vld [vmem:[#allocation6 + $0x18] sm:$0xf]
    %v103 = vld [vmem:[#allocation6 + $0x1c] sm:$0xf]
    %v104 = vmax.bf16 %v96, 0
    %v105 = vmax.bf16 %v97, 0
    %v106 = vmax.bf16 %v98, 0
    %v107 = vmax.bf16 %v99, 0
    %v108 = vmax.bf16 %v100, 0
    %v109 = vmax.bf16 %v101, 0
    %v110 = vmax.bf16 %v102, 0
    %v111 = vmax.bf16 %v103, 0
    %v112 = vld [vmem:[#allocation11] sm:$0xff]
    %v113 = vld [vmem:[#allocation11 + $0x8] sm:$0xf]
    %v114 = vld [vmem:[#allocation11 + $0xc] sm:$0xff]
    %v115 = vld [vmem:[#allocation11 + $0x14] sm:$0xf]
    %v116 = vld [vmem:[#allocation11 + $0x18] sm:$0xff]
    %v117 = vld [vmem:[#allocation11 + $0x20] sm:$0xf]
    %v118 = vld [vmem:[#allocation11 + $0x24] sm:$0xff]
    %v119 = vld [vmem:[#allocation11 + $0x2c] sm:$0xf]
    %v120 = vld [vmem:[#allocation11 + $0x30] sm:$0xff]
    %v121 = vld [vmem:[#allocation11 + $0x38] sm:$0xf]
    %v122 = vld [vmem:[#allocation11 + $0x3c] sm:$0xff]
    %v123 = vld [vmem:[#allocation11 + $0x44] sm:$0xf]
    %v124 = vld [vmem:[#allocation11 + $0x48] sm:$0xff]
    %v125 = vld [vmem:[#allocation11 + $0x50] sm:$0xf]
    %v126 = vld [vmem:[#allocation11 + $0x54] sm:$0xff]
    %v127 = vld [vmem:[#allocation11 + $0x5c] sm:$0xf]
    %v128 = vld [vmem:[#allocation11 + $0x60] sm:$0xff]
    %v129 = vld [vmem:[#allocation11 + $0x68] sm:$0xf]
    %v130 = vld [vmem:[#allocation11 + $0x6c] sm:$0xff]
    %v131 = vld [vmem:[#allocation11 + $0x74] sm:$0xf]
    %v132 = vld [vmem:[#allocation11 + $0x78] sm:$0xff]
    %v133 = vld [vmem:[#allocation11 + $0x80] sm:$0xf]
    %v134 = vld [vmem:[#allocation11 + $0x84] sm:$0xff]
    %v135 = vld [vmem:[#allocation11 + $0x8c] sm:$0xf]
    %v136 = vld [vmem:[#allocation11 + $0x90] sm:$0xff]
    %v137 = vld [vmem:[#allocation11 + $0x98] sm:$0xf]
    %v138 = vld [vmem:[#allocation11 + $0x9c] sm:$0xff]
    %v139 = vld [vmem:[#allocation11 + $0xa4] sm:$0xf]
    %v140 = vld [vmem:[#allocation11 + $0xa8] sm:$0xff]
    %v141 = vld [vmem:[#allocation11 + $0xb0] sm:$0xf]
    %v142 = vld [vmem:[#allocation11 + $0xb4] sm:$0xff]
    %v143 = vld [vmem:[#allocation11 + $0xbc] sm:$0xf]
    %v144 = vld [vmem:[%s4] sm:$0x7]
    %v146 = vlaneseq
    %v147 = vshrl.u32 %v146, 7
    %v148 = vsub.s32 0, %v147
    %v149 = vrot.slane %v144, %v148
    %v150 = vlaneseq
    %v151 = vshrl.u32 %v150, 7
    %v152 = vsub.s32 1, %v151
    %v153 = vrot.slane %v144, %v152
    %v154 = vlaneseq
    %v155 = vshrl.u32 %v154, 7
    %v156 = vsub.s32 2, %v155
    %v157 = vrot.slane %v144, %v156
    %v169 = vunpack.c.l.b16 %v104
    %v170 = vunpack.c.l.b16 %v105
    %v171 = vunpack.c.l.b16 %v106
    %v172 = vunpack.c.l.b16 %v107
    %v173 = vunpack.c.l.b16 %v108
    %v174 = vunpack.c.l.b16 %v109
    %v175 = vunpack.c.l.b16 %v110
    %v176 = vunpack.c.l.b16 %v111
    %v177 = vpack.c.b16 %v170, %v169
    %v178 = vpack.c.b16 %v172, %v171
    %v179 = vpack.c.b16 %v174, %v173
    %v180 = vpack.c.b16 %v176, %v175
    %v217 = vunpack.c.l.b16 %v112
    %v218 = vunpack.c.h.b16 %v112
    %v219 = vunpack.c.l.b16 %v113
    %v220 = vunpack.c.l.b16 %v114
    %v221 = vunpack.c.h.b16 %v114
    %v222 = vunpack.c.l.b16 %v115
    %v223 = vunpack.c.l.b16 %v116
    %v224 = vunpack.c.h.b16 %v116
    %v225 = vunpack.c.l.b16 %v117
    %v226 = vunpack.c.l.b16 %v118
    %v227 = vunpack.c.h.b16 %v118
    %v228 = vunpack.c.l.b16 %v119
    %v229 = vunpack.c.l.b16 %v120
    %v230 = vunpack.c.h.b16 %v120
    %v231 = vunpack.c.l.b16 %v121
    %v232 = vunpack.c.l.b16 %v122
    %v233 = vunpack.c.h.b16 %v122
    %v234 = vunpack.c.l.b16 %v123
    %v235 = vunpack.c.l.b16 %v124
    %v236 = vunpack.c.h.b16 %v124
    %v237 = vunpack.c.l.b16 %v125
    %v238 = vunpack.c.l.b16 %v126
    %v239 = vunpack.c.h.b16 %v126
    %v240 = vunpack.c.l.b16 %v127
    %v241 = vunpack.c.l.b16 %v128
    %v242 = vunpack.c.h.b16 %v128
    %v243 = vunpack.c.l.b16 %v129
    %v244 = vunpack.c.l.b16 %v130
    %v245 = vunpack.c.h.b16 %v130
    %v246 = vunpack.c.l.b16 %v131
    %v247 = vunpack.c.l.b16 %v132
    %v248 = vunpack.c.h.b16 %v132
    %v249 = vunpack.c.l.b16 %v133
    %v250 = vunpack.c.l.b16 %v134
    %v251 = vunpack.c.h.b16 %v134
    %v252 = vunpack.c.l.b16 %v135
    %v253 = vunpack.c.l.b16 %v136
    %v254 = vunpack.c.h.b16 %v136
    %v255 = vunpack.c.l.b16 %v137
    %v256 = vunpack.c.l.b16 %v138
    %v257 = vunpack.c.h.b16 %v138
    %v258 = vunpack.c.l.b16 %v139
    %v259 = vunpack.c.l.b16 %v140
    %v260 = vunpack.c.h.b16 %v140
    %v261 = vunpack.c.l.b16 %v141
    %v262 = vunpack.c.l.b16 %v142
    %v263 = vunpack.c.h.b16 %v142
    %v264 = vunpack.c.l.b16 %v143
    %v265 = vpack.c.b16 %v220, %v217
    %v266 = vpack.c.b16 %v221, %v218
    %v267 = vpack.c.b16 %v222, %v219
    %v268 = vpack.c.b16 %v226, %v223
    %v269 = vpack.c.b16 %v227, %v224
    %v270 = vpack.c.b16 %v228, %v225
    %v271 = vpack.c.b16 %v232, %v229
    %v272 = vpack.c.b16 %v233, %v230
    %v273 = vpack.c.b16 %v234, %v231
    %v274 = vpack.c.b16 %v238, %v235
    %v275 = vpack.c.b16 %v239, %v236
    %v276 = vpack.c.b16 %v240, %v237
    %v277 = vpack.c.b16 %v244, %v241
    %v278 = vpack.c.b16 %v245, %v242
    %v279 = vpack.c.b16 %v246, %v243
    %v280 = vpack.c.b16 %v250, %v247
    %v281 = vpack.c.b16 %v251, %v248
    %v282 = vpack.c.b16 %v252, %v249
    %v283 = vpack.c.b16 %v256, %v253
    %v284 = vpack.c.b16 %v257, %v254
    %v285 = vpack.c.b16 %v258, %v255
    %v286 = vpack.c.b16 %v262, %v259
    %v287 = vpack.c.b16 %v263, %v260
    %v288 = vpack.c.b16 %v264, %v261
    %313 = vmatprep.subr.bf16.mxu0 %v266
    %314 = vmatpush1.bf16.msra.mxu0 %v265
    %315 = vmatprep.subr.bf16.mxu0 %v269
    %316 = vmatpush1.bf16.msra.mxu0 %v268
    %317 = vmatprep.subr.bf16.mxu0 %v272
    %318 = vmatpush1.bf16.msra.mxu0 %v271
    %319 = vmatprep.subr.bf16.mxu0 %v275
    %320 = vmatpush1.bf16.msra.mxu0 %v274
    %321 = vmatprep.subr.bf16.mxu0 %v278
    %322 = vmatpush1.bf16.msra.mxu0 %v277
    %323 = vmatprep.subr.bf16.mxu0 %v281
    %324 = vmatpush1.bf16.msra.mxu0 %v280
    %325 = vmatprep.subr.bf16.mxu0 %v284
    %326 = vmatpush1.bf16.msra.mxu0 %v283
    %327 = vmatprep.subr.bf16.mxu0 %v287
    %328 = vmatpush1.bf16.msra.mxu0 %v286
    %329 = vmatprep.subr.bf16.mxu0 0
    %330 = vmatpush1.bf16.msra.mxu0 0
    %331 = vmatprep.subr.bf16.mxu0 0
    %332 = vmatpush1.bf16.msra.mxu0 0
    %333 = vmatprep.subr.bf16.mxu0 0
    %334 = vmatpush1.bf16.msra.mxu0 0
    %335 = vmatprep.subr.bf16.mxu0 0
    %336 = vmatpush1.bf16.msra.mxu0 0
    %337 = vmatprep.subr.bf16.mxu0 0
    %338 = vmatpush1.bf16.msra.mxu0 0
    %339 = vmatprep.subr.bf16.mxu0 0
    %340 = vmatpush1.bf16.msra.mxu0 0
    %341 = vmatprep.subr.bf16.mxu0 0
    %342 = vmatpush1.bf16.msra.mxu0 0
    %343 = vmatprep.subr.bf16.mxu0 0
    %344 = vmatpush1.bf16.msra.mxu0 0
    %345 = vmatprep.mubr.bf16.mxu0 0
    %346 = vmatmul.mubr.bf16.gmra.mrb[0].mxu0 %v177
    %v347 = vpop.f32.mrb[0].mxu0
    %v348 = vadd.f32 %v149, %v347
    %v349 = vpop.f32.mrb[0].mxu0
    %v350 = vadd.f32 %v153, %v349
    %v351 = vpop.f32.mrb[0].mxu0
    %v352 = vadd.f32 %v149, %v351
    %v353 = vpop.f32.mrb[0].mxu0
    %v354 = vadd.f32 %v153, %v353
    %355 = vmatprep.mubr.bf16.mxu0 0
    %356 = vmatmul.mubr.bf16.gmra.mrb[0].mxu0 %v178
    %v357 = vpop.f32.mrb[0].mxu0
    %v358 = vadd.f32 %v149, %v357
    %v359 = vpop.f32.mrb[0].mxu0
    %v360 = vadd.f32 %v153, %v359
    %v361 = vpop.f32.mrb[0].mxu0
    %v362 = vadd.f32 %v149, %v361
    %v363 = vpop.f32.mrb[0].mxu0
    %v364 = vadd.f32 %v153, %v363
    %365 = vmatprep.mubr.bf16.mxu0 0
    %366 = vmatmul.mubr.bf16.gmra.mrb[0].mxu0 %v179
    %v367 = vpop.f32.mrb[0].mxu0
    %v368 = vadd.f32 %v149, %v367
    %v369 = vpop.f32.mrb[0].mxu0
    %v370 = vadd.f32 %v153, %v369
    %v371 = vpop.f32.mrb[0].mxu0
    %v372 = vadd.f32 %v149, %v371
    %v373 = vpop.f32.mrb[0].mxu0
    %v374 = vadd.f32 %v153, %v373
    %375 = vmatprep.mubr.bf16.mxu0 0
    %376 = vmatmul.mubr.bf16.gmra.mrb[0].mxu0 %v180
    %v377 = vpop.f32.mrb[0].mxu0
    %v378 = vadd.f32 %v149, %v377
    %v379 = vpop.f32.mrb[0].mxu0
    %v380 = vadd.f32 %v153, %v379
    %v381 = vpop.f32.mrb[0].mxu0
    %v382 = vadd.f32 %v149, %v381
    %v383 = vpop.f32.mrb[0].mxu0
    %v384 = vadd.f32 %v153, %v383
    %385 = vdwg.mxu0
    %386 = vmatprep.subr.bf16.mxu0 0
    %387 = vmatpush1.bf16.msra.mxu0 %v267
    %388 = vmatprep.subr.bf16.mxu0 0
    %389 = vmatpush1.bf16.msra.mxu0 %v270
    %390 = vmatprep.subr.bf16.mxu0 0
    %391 = vmatpush1.bf16.msra.mxu0 %v273
    %392 = vmatprep.subr.bf16.mxu0 0
    %393 = vmatpush1.bf16.msra.mxu0 %v276
    %394 = vmatprep.subr.bf16.mxu0 0
    %395 = vmatpush1.bf16.msra.mxu0 %v279
    %396 = vmatprep.subr.bf16.mxu0 0
    %397 = vmatpush1.bf16.msra.mxu0 %v282
    %398 = vmatprep.subr.bf16.mxu0 0
    %399 = vmatpush1.bf16.msra.mxu0 %v285
    %400 = vmatprep.subr.bf16.mxu0 0
    %401 = vmatpush1.bf16.msra.mxu0 %v288
    %402 = vmatprep.subr.bf16.mxu0 0
    %403 = vmatpush1.bf16.msra.mxu0 0
    %404 = vmatprep.subr.bf16.mxu0 0
    %405 = vmatpush1.bf16.msra.mxu0 0
    %406 = vmatprep.subr.bf16.mxu0 0
    %407 = vmatpush1.bf16.msra.mxu0 0
    %408 = vmatprep.subr.bf16.mxu0 0
    %409 = vmatpush1.bf16.msra.mxu0 0
    %410 = vmatprep.subr.bf16.mxu0 0
    %411 = vmatpush1.bf16.msra.mxu0 0
    %412 = vmatprep.subr.bf16.mxu0 0
    %413 = vmatpush1.bf16.msra.mxu0 0
    %414 = vmatprep.subr.bf16.mxu0 0
    %415 = vmatpush1.bf16.msra.mxu0 0
    %416 = vmatprep.subr.bf16.mxu0 0
    %417 = vmatpush1.bf16.msra.mxu0 0
    %418 = vmatprep.mubr.bf16.mxu0 0
    %419 = vmatmul.mubr.bf16.gmra.mrb[0].mxu0 %v177
    %v420 = vpop.f32.mrb[0].mxu0
    %v421 = vadd.f32 %v157, %v420
    %v422 = vpop.f32.mrb[0].mxu0
    %v423 = vpop.f32.mrb[0].mxu0
    %v424 = vadd.f32 %v157, %v423
    %v425 = vpop.f32.mrb[0].mxu0
    %426 = vmatprep.mubr.bf16.mxu0 0
    %427 = vmatmul.mubr.bf16.gmra.mrb[0].mxu0 %v178
    %v428 = vpop.f32.mrb[0].mxu0
    %v429 = vadd.f32 %v157, %v428
    %v430 = vpop.f32.mrb[0].mxu0
    %v431 = vpop.f32.mrb[0].mxu0
    %v432 = vadd.f32 %v157, %v431
    %v433 = vpop.f32.mrb[0].mxu0
    %434 = vmatprep.mubr.bf16.mxu0 0
    %435 = vmatmul.mubr.bf16.gmra.mrb[0].mxu0 %v179
    %v436 = vpop.f32.mrb[0].mxu0
    %v437 = vadd.f32 %v157, %v436
    %v438 = vpop.f32.mrb[0].mxu0
    %v439 = vpop.f32.mrb[0].mxu0
    %v440 = vadd.f32 %v157, %v439
    %v441 = vpop.f32.mrb[0].mxu0
    %442 = vmatprep.mubr.bf16.mxu0 0
    %443 = vmatmul.mubr.bf16.gmra.mrb[0].mxu0 %v180
    %v444 = vpop.f32.mrb[0].mxu0
    %v445 = vadd.f32 %v157, %v444
    %v446 = vpop.f32.mrb[0].mxu0
    %v447 = vpop.f32.mrb[0].mxu0
    %v448 = vadd.f32 %v157, %v447
    %v449 = vpop.f32.mrb[0].mxu0
    %450 = vdwg.mxu0
    %v451 = vpack.c.bf16 %v348, %v348
    %v452 = vpack.c.bf16 %v350, %v350
    %v453 = vpack.c.bf16 %v421, %v421
    %v454 = vpack.c.bf16 %v352, %v352
    %v455 = vpack.c.bf16 %v354, %v354
    %v456 = vpack.c.bf16 %v424, %v424
    %v457 = vpack.c.bf16 %v358, %v358
    %v458 = vpack.c.bf16 %v360, %v360
    %v459 = vpack.c.bf16 %v429, %v429
    %v460 = vpack.c.bf16 %v362, %v362
    %v461 = vpack.c.bf16 %v364, %v364
    %v462 = vpack.c.bf16 %v432, %v432
    %v463 = vpack.c.bf16 %v368, %v368
    %v464 = vpack.c.bf16 %v370, %v370
    %v465 = vpack.c.bf16 %v437, %v437
    %v466 = vpack.c.bf16 %v372, %v372
    %v467 = vpack.c.bf16 %v374, %v374
    %v468 = vpack.c.bf16 %v440, %v440
    %v469 = vpack.c.bf16 %v378, %v378
    %v470 = vpack.c.bf16 %v380, %v380
    %v471 = vpack.c.bf16 %v445, %v445
    %v472 = vpack.c.bf16 %v382, %v382
    %v473 = vpack.c.bf16 %v384, %v384
    %v474 = vpack.c.bf16 %v448, %v448
    %v499 = vunpack.c.l.b16 %v451
    %v500 = vunpack.c.l.b16 %v452
    %v501 = vunpack.c.l.b16 %v453
    %v502 = vunpack.c.l.b16 %v454
    %v503 = vunpack.c.l.b16 %v455
    %v504 = vunpack.c.l.b16 %v456
    %v505 = vunpack.c.l.b16 %v457
    %v506 = vunpack.c.l.b16 %v458
    %v507 = vunpack.c.l.b16 %v459
    %v508 = vunpack.c.l.b16 %v460
    %v509 = vunpack.c.l.b16 %v461
    %v510 = vunpack.c.l.b16 %v462
    %v511 = vunpack.c.l.b16 %v463
    %v512 = vunpack.c.l.b16 %v464
    %v513 = vunpack.c.l.b16 %v465
    %v514 = vunpack.c.l.b16 %v466
    %v515 = vunpack.c.l.b16 %v467
    %v516 = vunpack.c.l.b16 %v468
    %v517 = vunpack.c.l.b16 %v469
    %v518 = vunpack.c.l.b16 %v470
    %v519 = vunpack.c.l.b16 %v471
    %v520 = vunpack.c.l.b16 %v472
    %v521 = vunpack.c.l.b16 %v473
    %v522 = vunpack.c.l.b16 %v474
    %v523 = vpack.c.b16 %v500, %v499
    %v524 = vpack.c.b16 %v501, %v501
    %v525 = vpack.c.b16 %v503, %v502
    %v526 = vpack.c.b16 %v504, %v504
    %v527 = vpack.c.b16 %v506, %v505
    %v528 = vpack.c.b16 %v507, %v507
    %v529 = vpack.c.b16 %v509, %v508
    %v530 = vpack.c.b16 %v510, %v510
    %v531 = vpack.c.b16 %v512, %v511
    %v532 = vpack.c.b16 %v513, %v513
    %v533 = vpack.c.b16 %v515, %v514
    %v534 = vpack.c.b16 %v516, %v516
    %v535 = vpack.c.b16 %v518, %v517
    %v536 = vpack.c.b16 %v519, %v519
    %v537 = vpack.c.b16 %v521, %v520
    %v538 = vpack.c.b16 %v522, %v522
    %555 = vst [vmem:[#allocation2] sm:$0xff] %v523
    %556 = vst [vmem:[#allocation2 + $0x8] sm:$0xf] %v524
    %557 = vst [vmem:[#allocation2 + $0xc] sm:$0xff] %v525
    %558 = vst [vmem:[#allocation2 + $0x14] sm:$0xf] %v526
    %559 = vst [vmem:[#allocation2 + $0x18] sm:$0xff] %v527
    %560 = vst [vmem:[#allocation2 + $0x20] sm:$0xf] %v528
    %561 = vst [vmem:[#allocation2 + $0x24] sm:$0xff] %v529
    %562 = vst [vmem:[#allocation2 + $0x2c] sm:$0xf] %v530
    %563 = vst [vmem:[#allocation2 + $0x30] sm:$0xff] %v531
    %564 = vst [vmem:[#allocation2 + $0x38] sm:$0xf] %v532
    %565 = vst [vmem:[#allocation2 + $0x3c] sm:$0xff] %v533
    %566 = vst [vmem:[#allocation2 + $0x44] sm:$0xf] %v534
    %567 = vst [vmem:[#allocation2 + $0x48] sm:$0xff] %v535
    %568 = vst [vmem:[#allocation2 + $0x50] sm:$0xf] %v536
    %569 = vst [vmem:[#allocation2 + $0x54] sm:$0xff] %v537
    %570 = vst [vmem:[#allocation2 + $0x5c] sm:$0xf] %v538
    %v571 = vld [vmem:[%s5] sm:$0x1]
    %v573 = vlaneseq
    %v574 = vshrl.u32 %v573, 7
    %v575 = vsub.s32 0, %v574
    %v576 = vrot.slane %v571, %v575
    %v578 = vld [vmem:[#allocation12] sm:$0xff]
    %v579 = vld [vmem:[#allocation12 + $0x8] sm:$0xf]
    %v580 = vld [vmem:[#allocation12 + $0xc] sm:$0xff]
    %v581 = vld [vmem:[#allocation12 + $0x14] sm:$0xf]
    %v582 = vld [vmem:[#allocation12 + $0x18] sm:$0xff]
    %v583 = vld [vmem:[#allocation12 + $0x20] sm:$0xf]
    %v584 = vld [vmem:[#allocation12 + $0x24] sm:$0xff]
    %v585 = vld [vmem:[#allocation12 + $0x2c] sm:$0xf]
    %v586 = vld [vmem:[#allocation12 + $0x30] sm:$0xff]
    %v587 = vld [vmem:[#allocation12 + $0x38] sm:$0xf]
    %v588 = vld [vmem:[#allocation12 + $0x3c] sm:$0xff]
    %v589 = vld [vmem:[#allocation12 + $0x44] sm:$0xf]
    %v590 = vld [vmem:[#allocation12 + $0x48] sm:$0xff]
    %v591 = vld [vmem:[#allocation12 + $0x50] sm:$0xf]
    %v592 = vld [vmem:[#allocation12 + $0x54] sm:$0xff]
    %v593 = vld [vmem:[#allocation12 + $0x5c] sm:$0xf]
    %v594 = vld [vmem:[#allocation12 + $0x60] sm:$0xff]
    %v595 = vld [vmem:[#allocation12 + $0x68] sm:$0xf]
    %v596 = vld [vmem:[#allocation12 + $0x6c] sm:$0xff]
    %v597 = vld [vmem:[#allocation12 + $0x74] sm:$0xf]
    %v598 = vld [vmem:[#allocation12 + $0x78] sm:$0xff]
    %v599 = vld [vmem:[#allocation12 + $0x80] sm:$0xf]
    %v600 = vld [vmem:[#allocation12 + $0x84] sm:$0xff]
    %v601 = vld [vmem:[#allocation12 + $0x8c] sm:$0xf]
    %v602 = vld [vmem:[#allocation12 + $0x90] sm:$0xff]
    %v603 = vld [vmem:[#allocation12 + $0x98] sm:$0xf]
    %v604 = vld [vmem:[#allocation12 + $0x9c] sm:$0xff]
    %v605 = vld [vmem:[#allocation12 + $0xa4] sm:$0xf]
    %v606 = vld [vmem:[#allocation12 + $0xa8] sm:$0xff]
    %v607 = vld [vmem:[#allocation12 + $0xb0] sm:$0xf]
    %v608 = vld [vmem:[#allocation12 + $0xb4] sm:$0xff]
    %v609 = vld [vmem:[#allocation12 + $0xbc] sm:$0xf]
    %v610 = vld [vmem:[#allocation9] sm:$0xff]
    %v611 = vld [vmem:[#allocation2] sm:$0xff]
    %v612 = vld [vmem:[#allocation2 + $0x8] sm:$0xf]
    %v613 = vunpack.c.l.bf16 %v611
    %v614 = vunpack.c.h.bf16 %v611
    %v615 = vunpack.c.l.bf16 %v612
    %v616 = vpack.c.bf16 %v610, %v610
    %v649 = vunpack.c.l.b16 %v578
    %v650 = vunpack.c.h.b16 %v578
    %v651 = vunpack.c.l.b16 %v579
    %v652 = vunpack.c.l.b16 %v580
    %v653 = vunpack.c.h.b16 %v580
    %v654 = vunpack.c.l.b16 %v581
    %v655 = vunpack.c.l.b16 %v582
    %v656 = vunpack.c.h.b16 %v582
    %v657 = vunpack.c.l.b16 %v583
    %v658 = vunpack.c.l.b16 %v584
    %v659 = vunpack.c.h.b16 %v584
    %v660 = vunpack.c.l.b16 %v585
    %v661 = vunpack.c.l.b16 %v586
    %v662 = vunpack.c.h.b16 %v586
    %v663 = vunpack.c.l.b16 %v587
    %v664 = vunpack.c.l.b16 %v588
    %v665 = vunpack.c.h.b16 %v588
    %v666 = vunpack.c.l.b16 %v589
    %v667 = vunpack.c.l.b16 %v590
    %v668 = vunpack.c.h.b16 %v590
    %v669 = vunpack.c.l.b16 %v591
    %v670 = vunpack.c.l.b16 %v592
    %v671 = vunpack.c.h.b16 %v592
    %v672 = vunpack.c.l.b16 %v593
    %v673 = vunpack.c.l.b16 %v594
    %v674 = vunpack.c.h.b16 %v594
    %v675 = vunpack.c.l.b16 %v595
    %v676 = vunpack.c.l.b16 %v596
    %v677 = vunpack.c.h.b16 %v596
    %v678 = vunpack.c.l.b16 %v597
    %v679 = vunpack.c.l.b16 %v598
    %v680 = vunpack.c.h.b16 %v598
    %v681 = vunpack.c.l.b16 %v599
    %v682 = vunpack.c.l.b16 %v600
    %v683 = vunpack.c.h.b16 %v600
    %v684 = vunpack.c.l.b16 %v601
    %v685 = vunpack.c.l.b16 %v602
    %v686 = vunpack.c.h.b16 %v602
    %v687 = vunpack.c.l.b16 %v603
    %v688 = vunpack.c.l.b16 %v604
    %v689 = vunpack.c.h.b16 %v604
    %v690 = vunpack.c.l.b16 %v605
    %v691 = vunpack.c.l.b16 %v606
    %v692 = vunpack.c.h.b16 %v606
    %v693 = vunpack.c.l.b16 %v607
    %v694 = vunpack.c.l.b16 %v608
    %v695 = vunpack.c.h.b16 %v608
    %v696 = vunpack.c.l.b16 %v609
    %v697 = vpack.c.b16 %v652, %v649
    %v698 = vpack.c.b16 %v653, %v650
    %v699 = vpack.c.b16 %v654, %v651
    %v700 = vpack.c.b16 %v658, %v655
    %v701 = vpack.c.b16 %v659, %v656
    %v702 = vpack.c.b16 %v660, %v657
    %v703 = vpack.c.b16 %v664, %v661
    %v704 = vpack.c.b16 %v665, %v662
    %v705 = vpack.c.b16 %v666, %v663
    %v706 = vpack.c.b16 %v670, %v667
    %v707 = vpack.c.b16 %v671, %v668
    %v708 = vpack.c.b16 %v672, %v669
    %v709 = vpack.c.b16 %v676, %v673
    %v710 = vpack.c.b16 %v677, %v674
    %v711 = vpack.c.b16 %v678, %v675
    %v712 = vpack.c.b16 %v682, %v679
    %v713 = vpack.c.b16 %v683, %v680
    %v714 = vpack.c.b16 %v684, %v681
    %v715 = vpack.c.b16 %v688, %v685
    %v716 = vpack.c.b16 %v689, %v686
    %v717 = vpack.c.b16 %v690, %v687
    %v718 = vpack.c.b16 %v694, %v691
    %v719 = vpack.c.b16 %v695, %v692
    %v720 = vpack.c.b16 %v696, %v693
    %745 = vmatprep.subr.bf16.mxu0 %v698
    %746 = vmatpush1.bf16.msra.mxu0 %v697
    %747 = vmatprep.subr.bf16.mxu0 %v701
    %748 = vmatpush1.bf16.msra.mxu0 %v700
    %749 = vmatprep.subr.bf16.mxu0 %v704
    %750 = vmatpush1.bf16.msra.mxu0 %v703
    %751 = vmatprep.subr.bf16.mxu0 %v707
    %752 = vmatpush1.bf16.msra.mxu0 %v706
    %753 = vmatprep.subr.bf16.mxu0 %v710
    %754 = vmatpush1.bf16.msra.mxu0 %v709
    %755 = vmatprep.subr.bf16.mxu0 %v713
    %756 = vmatpush1.bf16.msra.mxu0 %v712
    %757 = vmatprep.subr.bf16.mxu0 %v716
    %758 = vmatpush1.bf16.msra.mxu0 %v715
    %759 = vmatprep.subr.bf16.mxu0 %v719
    %760 = vmatpush1.bf16.msra.mxu0 %v718
    %761 = vmatprep.subr.bf16.mxu0 0
    %762 = vmatpush1.bf16.msra.mxu0 0
    %763 = vmatprep.subr.bf16.mxu0 0
    %764 = vmatpush1.bf16.msra.mxu0 0
    %765 = vmatprep.subr.bf16.mxu0 0
    %766 = vmatpush1.bf16.msra.mxu0 0
    %767 = vmatprep.subr.bf16.mxu0 0
    %768 = vmatpush1.bf16.msra.mxu0 0
    %769 = vmatprep.subr.bf16.mxu0 0
    %770 = vmatpush1.bf16.msra.mxu0 0
    %771 = vmatprep.subr.bf16.mxu0 0
    %772 = vmatpush1.bf16.msra.mxu0 0
    %773 = vmatprep.subr.bf16.mxu0 0
    %774 = vmatpush1.bf16.msra.mxu0 0
    %775 = vmatprep.subr.bf16.mxu0 0
    %776 = vmatpush1.bf16.msra.mxu0 0
    %777 = vmatprep.mubr.bf16.mxu0 0
    %778 = vmatmul.mubr.bf16.gmra.mrb[0].mxu0 %v616
    %v779 = vpop.f32.mrb[0].mxu0
    %v780 = vadd.f32 0.0, %v779
    %v781 = vpop.f32.mrb[0].mxu0
    %v782 = vadd.f32 0.0, %v781
    %v783 = vpop.f32.mrb[0].mxu0
    %v784 = vpop.f32.mrb[0].mxu0
    %785 = vdwg.mxu0
    %786 = vmatprep.subr.bf16.mxu0 0
    %787 = vmatpush1.bf16.msra.mxu0 %v699
    %788 = vmatprep.subr.bf16.mxu0 0
    %789 = vmatpush1.bf16.msra.mxu0 %v702
    %790 = vmatprep.subr.bf16.mxu0 0
    %791 = vmatpush1.bf16.msra.mxu0 %v705
    %792 = vmatprep.subr.bf16.mxu0 0
    %793 = vmatpush1.bf16.msra.mxu0 %v708
    %794 = vmatprep.subr.bf16.mxu0 0
    %795 = vmatpush1.bf16.msra.mxu0 %v711
    %796 = vmatprep.subr.bf16.mxu0 0
    %797 = vmatpush1.bf16.msra.mxu0 %v714
    %798 = vmatprep.subr.bf16.mxu0 0
    %799 = vmatpush1.bf16.msra.mxu0 %v717
    %800 = vmatprep.subr.bf16.mxu0 0
    %801 = vmatpush1.bf16.msra.mxu0 %v720
    %802 = vmatprep.subr.bf16.mxu0 0
    %803 = vmatpush1.bf16.msra.mxu0 0
    %804 = vmatprep.subr.bf16.mxu0 0
    %805 = vmatpush1.bf16.msra.mxu0 0
    %806 = vmatprep.subr.bf16.mxu0 0
    %807 = vmatpush1.bf16.msra.mxu0 0
    %808 = vmatprep.subr.bf16.mxu0 0
    %809 = vmatpush1.bf16.msra.mxu0 0
    %810 = vmatprep.subr.bf16.mxu0 0
    %811 = vmatpush1.bf16.msra.mxu0 0
    %812 = vmatprep.subr.bf16.mxu0 0
    %813 = vmatpush1.bf16.msra.mxu0 0
    %814 = vmatprep.subr.bf16.mxu0 0
    %815 = vmatpush1.bf16.msra.mxu0 0
    %816 = vmatprep.subr.bf16.mxu0 0
    %817 = vmatpush1.bf16.msra.mxu0 0
    %818 = vmatprep.mubr.bf16.mxu0 0
    %819 = vmatmul.mubr.bf16.gmra.mrb[0].mxu0 %v616
    %v820 = vpop.f32.mrb[0].mxu0
    %v821 = vadd.f32 0.0, %v820
    %v822 = vpop.f32.mrb[0].mxu0
    %v823 = vpop.f32.mrb[0].mxu0
    %v824 = vpop.f32.mrb[0].mxu0
    %825 = vdwg.mxu0
    %v826 = vadd.f32 %v613, %v780
    %v827 = vxor.u32 %v826, 2147483648
    %v828 = vmul.f32 %v827, 1.442695
    %v829 = vpow.pop %v828
    %v830 = vadd.f32 %v829, 1.0
    %v831 = vrcp.pop %v830
    %v832 = vmul.f32 1.0, %v831
    %v833 = vadd.f32 %v614, %v782
    %v834 = vxor.u32 %v833, 2147483648
    %v835 = vmul.f32 %v834, 1.442695
    %v836 = vpow.pop %v835
    %v837 = vadd.f32 %v836, 1.0
    %v838 = vrcp.pop %v837
    %v839 = vmul.f32 1.0, %v838
    %v840 = vadd.f32 %v821, %v576
    %v841 = vmul.f32 %v832, %v840
    %v842 = vadd.f32 %v615, %v841
    %v843 = vtanh.pop %v842
    %v844 = vsub.f32 1.0, %v839
    %v845 = vmul.f32 %v844, %v843
    %v846 = vmul.f32 %v839, %v610
    %v847 = vadd.f32 %v845, %v846
    %848 = vst [vmem:[#allocation3] sm:$0xff] %v847
    %s849 = scalar_lea.vmem [#allocation2], 12
    %v850 = vld [vmem:[%s849] sm:$0xff]
    %v851 = vld [vmem:[%s849 + $0x8] sm:$0xf]
    %v852 = vunpack.c.l.bf16 %v850
    %v853 = vunpack.c.h.bf16 %v850
    %v854 = vunpack.c.l.bf16 %v851
    %v855 = vpack.c.bf16 %v847, %v847
    %856 = vmatprep.subr.bf16.mxu0 %v698
    %857 = vmatpush1.bf16.msra.mxu0 %v697
    %858 = vmatprep.subr.bf16.mxu0 %v701
    %859 = vmatpush1.bf16.msra.mxu0 %v700
    %860 = vmatprep.subr.bf16.mxu0 %v704
    %861 = vmatpush1.bf16.msra.mxu0 %v703
    %862 = vmatprep.subr.bf16.mxu0 %v707
    %863 = vmatpush1.bf16.msra.mxu0 %v706
    %864 = vmatprep.subr.bf16.mxu0 %v710
    %865 = vmatpush1.bf16.msra.mxu0 %v709
    %866 = vmatprep.subr.bf16.mxu0 %v713
    %867 = vmatpush1.bf16.msra.mxu0 %v712
    %868 = vmatprep.subr.bf16.mxu0 %v716
    %869 = vmatpush1.bf16.msra.mxu0 %v715
    %870 = vmatprep.subr.bf16.mxu0 %v719
    %871 = vmatpush1.bf16.msra.mxu0 %v718
    %872 = vmatprep.subr.bf16.mxu0 0
    %873 = vmatpush1.bf16.msra.mxu0 0
    %874 = vmatprep.subr.bf16.mxu0 0
    %875 = vmatpush1.bf16.msra.mxu0 0
    %876 = vmatprep.subr.bf16.mxu0 0
    %877 = vmatpush1.bf16.msra.mxu0 0
    %878 = vmatprep.subr.bf16.mxu0 0
    %879 = vmatpush1.bf16.msra.mxu0 0
    %880 = vmatprep.subr.bf16.mxu0 0
    %881 = vmatpush1.bf16.msra.mxu0 0
    %882 = vmatprep.subr.bf16.mxu0 0
    %883 = vmatpush1.bf16.msra.mxu0 0
    %884 = vmatprep.subr.bf16.mxu0 0
    %885 = vmatpush1.bf16.msra.mxu0 0
    %886 = vmatprep.subr.bf16.mxu0 0
    %887 = vmatpush1.bf16.msra.mxu0 0
    %888 = vmatprep.mubr.bf16.mxu0 0
    %889 = vmatmul.mubr.bf16.gmra.mrb[0].mxu0 %v855
    %v890 = vpop.f32.mrb[0].mxu0
    %v891 = vadd.f32 0.0, %v890
    %v892 = vpop.f32.mrb[0].mxu0
    %v893 = vadd.f32 0.0, %v892
    %v894 = vpop.f32.mrb[0].mxu0
    %v895 = vpop.f32.mrb[0].mxu0
    %896 = vdwg.mxu0
    %897 = vmatprep.subr.bf16.mxu0 0
    %898 = vmatpush1.bf16.msra.mxu0 %v699
    %899 = vmatprep.subr.bf16.mxu0 0
    %900 = vmatpush1.bf16.msra.mxu0 %v702
    %901 = vmatprep.subr.bf16.mxu0 0
    %902 = vmatpush1.bf16.msra.mxu0 %v705
    %903 = vmatprep.subr.bf16.mxu0 0
    %904 = vmatpush1.bf16.msra.mxu0 %v708
    %905 = vmatprep.subr.bf16.mxu0 0
    %906 = vmatpush1.bf16.msra.mxu0 %v711
    %907 = vmatprep.subr.bf16.mxu0 0
    %908 = vmatpush1.bf16.msra.mxu0 %v714
    %909 = vmatprep.subr.bf16.mxu0 0
    %910 = vmatpush1.bf16.msra.mxu0 %v717
    %911 = vmatprep.subr.bf16.mxu0 0
    %912 = vmatpush1.bf16.msra.mxu0 %v720
    %913 = vmatprep.subr.bf16.mxu0 0
    %914 = vmatpush1.bf16.msra.mxu0 0
    %915 = vmatprep.subr.bf16.mxu0 0
    %916 = vmatpush1.bf16.msra.mxu0 0
    %917 = vmatprep.subr.bf16.mxu0 0
    %918 = vmatpush1.bf16.msra.mxu0 0
    %919 = vmatprep.subr.bf16.mxu0 0
    %920 = vmatpush1.bf16.msra.mxu0 0
    %921 = vmatprep.subr.bf16.mxu0 0
    %922 = vmatpush1.bf16.msra.mxu0 0
    %923 = vmatprep.subr.bf16.mxu0 0
    %924 = vmatpush1.bf16.msra.mxu0 0
    %925 = vmatprep.subr.bf16.mxu0 0
    %926 = vmatpush1.bf16.msra.mxu0 0
    %927 = vmatprep.subr.bf16.mxu0 0
    %928 = vmatpush1.bf16.msra.mxu0 0
    %929 = vmatprep.mubr.bf16.mxu0 0
    %930 = vmatmul.mubr.bf16.gmra.mrb[0].mxu0 %v855
    %v931 = vpop.f32.mrb[0].mxu0
    %v932 = vadd.f32 0.0, %v931
    %v933 = vpop.f32.mrb[0].mxu0
    %v934 = vpop.f32.mrb[0].mxu0
    %v935 = vpop.f32.mrb[0].mxu0
    %936 = vdwg.mxu0
    %v937 = vadd.f32 %v852, %v891
    %v938 = vxor.u32 %v937, 2147483648
    %v939 = vmul.f32 %v938, 1.442695
    %v940 = vpow.pop %v939
    %v941 = vadd.f32 %v940, 1.0
    %v942 = vrcp.pop %v941
    %v943 = vmul.f32 1.0, %v942
    %v944 = vadd.f32 %v853, %v893
    %v945 = vxor.u32 %v944, 2147483648
    %v946 = vmul.f32 %v945, 1.442695
    %v947 = vpow.pop %v946
    %v948 = vadd.f32 %v947, 1.0
    %v949 = vrcp.pop %v948
    %v950 = vmul.f32 1.0, %v949
    %v951 = vadd.f32 %v932, %v576
    %v952 = vmul.f32 %v943, %v951
    %v953 = vadd.f32 %v854, %v952
    %v954 = vtanh.pop %v953
    %v955 = vsub.f32 1.0, %v950
    %v956 = vmul.f32 %v955, %v954
    %v957 = vmul.f32 %v950, %v847
    %v958 = vadd.f32 %v956, %v957
    %s959 = scalar_lea.vmem [#allocation3], 8
    %960 = vst [vmem:[%s959] sm:$0xff] %v958
    %s961 = scalar_lea.vmem [#allocation2], 24
    %v962 = vld [vmem:[%s961] sm:$0xff]
    %v963 = vld [vmem:[%s961 + $0x8] sm:$0xf]
    %v964 = vunpack.c.l.bf16 %v962
    %v965 = vunpack.c.h.bf16 %v962
    %v966 = vunpack.c.l.bf16 %v963
    %v967 = vpack.c.bf16 %v958, %v958
    %968 = vmatprep.subr.bf16.mxu0 %v698
    %969 = vmatpush1.bf16.msra.mxu0 %v697
    %970 = vmatprep.subr.bf16.mxu0 %v701
    %971 = vmatpush1.bf16.msra.mxu0 %v700
    %972 = vmatprep.subr.bf16.mxu0 %v704
    %973 = vmatpush1.bf16.msra.mxu0 %v703
    %974 = vmatprep.subr.bf16.mxu0 %v707
    %975 = vmatpush1.bf16.msra.mxu0 %v706
    %976 = vmatprep.subr.bf16.mxu0 %v710
    %977 = vmatpush1.bf16.msra.mxu0 %v709
    %978 = vmatprep.subr.bf16.mxu0 %v713
    %979 = vmatpush1.bf16.msra.mxu0 %v712
    %980 = vmatprep.subr.bf16.mxu0 %v716
    %981 = vmatpush1.bf16.msra.mxu0 %v715
    %982 = vmatprep.subr.bf16.mxu0 %v719
    %983 = vmatpush1.bf16.msra.mxu0 %v718
    %984 = vmatprep.subr.bf16.mxu0 0
    %985 = vmatpush1.bf16.msra.mxu0 0
    %986 = vmatprep.subr.bf16.mxu0 0
    %987 = vmatpush1.bf16.msra.mxu0 0
    %988 = vmatprep.subr.bf16.mxu0 0
    %989 = vmatpush1.bf16.msra.mxu0 0
    %990 = vmatprep.subr.bf16.mxu0 0
    %991 = vmatpush1.bf16.msra.mxu0 0
    %992 = vmatprep.subr.bf16.mxu0 0
    %993 = vmatpush1.bf16.msra.mxu0 0
    %994 = vmatprep.subr.bf16.mxu0 0
    %995 = vmatpush1.bf16.msra.mxu0 0
    %996 = vmatprep.subr.bf16.mxu0 0
    %997 = vmatpush1.bf16.msra.mxu0 0
    %998 = vmatprep.subr.bf16.mxu0 0
    %999 = vmatpush1.bf16.msra.mxu0 0
    %1000 = vmatprep.mubr.bf16.mxu0 0
    %1001 = vmatmul.mubr.bf16.gmra.mrb[0].mxu0 %v967
    %v1002 = vpop.f32.mrb[0].mxu0
    %v1003 = vadd.f32 0.0, %v1002
    %v1004 = vpop.f32.mrb[0].mxu0
    %v1005 = vadd.f32 0.0, %v1004
    %v1006 = vpop.f32.mrb[0].mxu0
    %v1007 = vpop.f32.mrb[0].mxu0
    %1008 = vdwg.mxu0
    %1009 = vmatprep.subr.bf16.mxu0 0
    %1010 = vmatpush1.bf16.msra.mxu0 %v699
    %1011 = vmatprep.subr.bf16.mxu0 0
    %1012 = vmatpush1.bf16.msra.mxu0 %v702
    %1013 = vmatprep.subr.bf16.mxu0 0
    %1014 = vmatpush1.bf16.msra.mxu0 %v705
    %1015 = vmatprep.subr.bf16.mxu0 0
    %1016 = vmatpush1.bf16.msra.mxu0 %v708
    %1017 = vmatprep.subr.bf16.mxu0 0
    %1018 = vmatpush1.bf16.msra.mxu0 %v711
    %1019 = vmatprep.subr.bf16.mxu0 0
    %1020 = vmatpush1.bf16.msra.mxu0 %v714
    %1021 = vmatprep.subr.bf16.mxu0 0
    %1022 = vmatpush1.bf16.msra.mxu0 %v717
    %1023 = vmatprep.subr.bf16.mxu0 0
    %1024 = vmatpush1.bf16.msra.mxu0 %v720
    %1025 = vmatprep.subr.bf16.mxu0 0
    %1026 = vmatpush1.bf16.msra.mxu0 0
    %1027 = vmatprep.subr.bf16.mxu0 0
    %1028 = vmatpush1.bf16.msra.mxu0 0
    %1029 = vmatprep.subr.bf16.mxu0 0
    %1030 = vmatpush1.bf16.msra.mxu0 0
    %1031 = vmatprep.subr.bf16.mxu0 0
    %1032 = vmatpush1.bf16.msra.mxu0 0
    %1033 = vmatprep.subr.bf16.mxu0 0
    %1034 = vmatpush1.bf16.msra.mxu0 0
    %1035 = vmatprep.subr.bf16.mxu0 0
    %1036 = vmatpush1.bf16.msra.mxu0 0
    %1037 = vmatprep.subr.bf16.mxu0 0
    %1038 = vmatpush1.bf16.msra.mxu0 0
    %1039 = vmatprep.subr.bf16.mxu0 0
    %1040 = vmatpush1.bf16.msra.mxu0 0
    %1041 = vmatprep.mubr.bf16.mxu0 0
    %1042 = vmatmul.mubr.bf16.gmra.mrb[0].mxu0 %v967
    %v1043 = vpop.f32.mrb[0].mxu0
    %v1044 = vadd.f32 0.0, %v1043
    %v1045 = vpop.f32.mrb[0].mxu0
    %v1046 = vpop.f32.mrb[0].mxu0
    %v1047 = vpop.f32.mrb[0].mxu0
    %1048 = vdwg.mxu0
    %v1049 = vadd.f32 %v964, %v1003
    %v1050 = vxor.u32 %v1049, 2147483648
    %v1051 = vmul.f32 %v1050, 1.442695
    %v1052 = vpow.pop %v1051
    %v1053 = vadd.f32 %v1052, 1.0
    %v1054 = vrcp.pop %v1053
    %v1055 = vmul.f32 1.0, %v1054
    %v1056 = vadd.f32 %v965, %v1005
    %v1057 = vxor.u32 %v1056, 2147483648
    %v1058 = vmul.f32 %v1057, 1.442695
    %v1059 = vpow.pop %v1058
    %v1060 = vadd.f32 %v1059, 1.0
    %v1061 = vrcp.pop %v1060
    %v1062 = vmul.f32 1.0, %v1061
    %v1063 = vadd.f32 %v1044, %v576
    %v1064 = vmul.f32 %v1055, %v1063
    %v1065 = vadd.f32 %v966, %v1064
    %v1066 = vtanh.pop %v1065
    %v1067 = vsub.f32 1.0, %v1062
    %v1068 = vmul.f32 %v1067, %v1066
    %v1069 = vmul.f32 %v1062, %v958
    %v1070 = vadd.f32 %v1068, %v1069
    %s1071 = scalar_lea.vmem [#allocation3], 16
    %1072 = vst [vmem:[%s1071] sm:$0xff] %v1070
    %s1073 = scalar_lea.vmem [#allocation2], 36
    %v1074 = vld [vmem:[%s1073] sm:$0xff]
    %v1075 = vld [vmem:[%s1073 + $0x8] sm:$0xf]
    %v1076 = vunpack.c.l.bf16 %v1074
    %v1077 = vunpack.c.h.bf16 %v1074
    %v1078 = vunpack.c.l.bf16 %v1075
    %v1079 = vpack.c.bf16 %v1070, %v1070
    %1080 = vmatprep.subr.bf16.mxu0 %v698
    %1081 = vmatpush1.bf16.msra.mxu0 %v697
    %1082 = vmatprep.subr.bf16.mxu0 %v701
    %1083 = vmatpush1.bf16.msra.mxu0 %v700
    %1084 = vmatprep.subr.bf16.mxu0 %v704
    %1085 = vmatpush1.bf16.msra.mxu0 %v703
    %1086 = vmatprep.subr.bf16.mxu0 %v707
    %1087 = vmatpush1.bf16.msra.mxu0 %v706
    %1088 = vmatprep.subr.bf16.mxu0 %v710
    %1089 = vmatpush1.bf16.msra.mxu0 %v709
    %1090 = vmatprep.subr.bf16.mxu0 %v713
    %1091 = vmatpush1.bf16.msra.mxu0 %v712
    %1092 = vmatprep.subr.bf16.mxu0 %v716
    %1093 = vmatpush1.bf16.msra.mxu0 %v715
    %1094 = vmatprep.subr.bf16.mxu0 %v719
    %1095 = vmatpush1.bf16.msra.mxu0 %v718
    %1096 = vmatprep.subr.bf16.mxu0 0
    %1097 = vmatpush1.bf16.msra.mxu0 0
    %1098 = vmatprep.subr.bf16.mxu0 0
    %1099 = vmatpush1.bf16.msra.mxu0 0
    %1100 = vmatprep.subr.bf16.mxu0 0
    %1101 = vmatpush1.bf16.msra.mxu0 0
    %1102 = vmatprep.subr.bf16.mxu0 0
    %1103 = vmatpush1.bf16.msra.mxu0 0
    %1104 = vmatprep.subr.bf16.mxu0 0
    %1105 = vmatpush1.bf16.msra.mxu0 0
    %1106 = vmatprep.subr.bf16.mxu0 0
    %1107 = vmatpush1.bf16.msra.mxu0 0
    %1108 = vmatprep.subr.bf16.mxu0 0
    %1109 = vmatpush1.bf16.msra.mxu0 0
    %1110 = vmatprep.subr.bf16.mxu0 0
    %1111 = vmatpush1.bf16.msra.mxu0 0
    %1112 = vmatprep.mubr.bf16.mxu0 0
    %1113 = vmatmul.mubr.bf16.gmra.mrb[0].mxu0 %v1079
    %v1114 = vpop.f32.mrb[0].mxu0
    %v1115 = vadd.f32 0.0, %v1114
    %v1116 = vpop.f32.mrb[0].mxu0
    %v1117 = vadd.f32 0.0, %v1116
    %v1118 = vpop.f32.mrb[0].mxu0
    %v1119 = vpop.f32.mrb[0].mxu0
    %1120 = vdwg.mxu0
    %1121 = vmatprep.subr.bf16.mxu0 0
    %1122 = vmatpush1.bf16.msra.mxu0 %v699
    %1123 = vmatprep.subr.bf16.mxu0 0
    %1124 = vmatpush1.bf16.msra.mxu0 %v702
    %1125 = vmatprep.subr.bf16.mxu0 0
    %1126 = vmatpush1.bf16.msra.mxu0 %v705
    %1127 = vmatprep.subr.bf16.mxu0 0
    %1128 = vmatpush1.bf16.msra.mxu0 %v708
    %1129 = vmatprep.subr.bf16.mxu0 0
    %1130 = vmatpush1.bf16.msra.mxu0 %v711
    %1131 = vmatprep.subr.bf16.mxu0 0
    %1132 = vmatpush1.bf16.msra.mxu0 %v714
    %1133 = vmatprep.subr.bf16.mxu0 0
    %1134 = vmatpush1.bf16.msra.mxu0 %v717
    %1135 = vmatprep.subr.bf16.mxu0 0
    %1136 = vmatpush1.bf16.msra.mxu0 %v720
    %1137 = vmatprep.subr.bf16.mxu0 0
    %1138 = vmatpush1.bf16.msra.mxu0 0
    %1139 = vmatprep.subr.bf16.mxu0 0
    %1140 = vmatpush1.bf16.msra.mxu0 0
    %1141 = vmatprep.subr.bf16.mxu0 0
    %1142 = vmatpush1.bf16.msra.mxu0 0
    %1143 = vmatprep.subr.bf16.mxu0 0
    %1144 = vmatpush1.bf16.msra.mxu0 0
    %1145 = vmatprep.subr.bf16.mxu0 0
    %1146 = vmatpush1.bf16.msra.mxu0 0
    %1147 = vmatprep.subr.bf16.mxu0 0
    %1148 = vmatpush1.bf16.msra.mxu0 0
    %1149 = vmatprep.subr.bf16.mxu0 0
    %1150 = vmatpush1.bf16.msra.mxu0 0
    %1151 = vmatprep.subr.bf16.mxu0 0
    %1152 = vmatpush1.bf16.msra.mxu0 0
    %1153 = vmatprep.mubr.bf16.mxu0 0
    %1154 = vmatmul.mubr.bf16.gmra.mrb[0].mxu0 %v1079
    %v1155 = vpop.f32.mrb[0].mxu0
    %v1156 = vadd.f32 0.0, %v1155
    %v1157 = vpop.f32.mrb[0].mxu0
    %v1158 = vpop.f32.mrb[0].mxu0
    %v1159 = vpop.f32.mrb[0].mxu0
    %1160 = vdwg.mxu0
    %v1161 = vadd.f32 %v1076, %v1115
    %v1162 = vxor.u32 %v1161, 2147483648
    %v1163 = vmul.f32 %v1162, 1.442695
    %v1164 = vpow.pop %v1163
    %v1165 = vadd.f32 %v1164, 1.0
    %v1166 = vrcp.pop %v1165
    %v1167 = vmul.f32 1.0, %v1166
    %v1168 = vadd.f32 %v1077, %v1117
    %v1169 = vxor.u32 %v1168, 2147483648
    %v1170 = vmul.f32 %v1169, 1.442695
    %v1171 = vpow.pop %v1170
    %v1172 = vadd.f32 %v1171, 1.0
    %v1173 = vrcp.pop %v1172
    %v1174 = vmul.f32 1.0, %v1173
    %v1175 = vadd.f32 %v1156, %v576
    %v1176 = vmul.f32 %v1167, %v1175
    %v1177 = vadd.f32 %v1078, %v1176
    %v1178 = vtanh.pop %v1177
    %v1179 = vsub.f32 1.0, %v1174
    %v1180 = vmul.f32 %v1179, %v1178
    %v1181 = vmul.f32 %v1174, %v1070
    %v1182 = vadd.f32 %v1180, %v1181
    %s1183 = scalar_lea.vmem [#allocation3], 24
    %1184 = vst [vmem:[%s1183] sm:$0xff] %v1182
    %s1185 = scalar_lea.vmem [#allocation2], 48
    %v1186 = vld [vmem:[%s1185] sm:$0xff]
    %v1187 = vld [vmem:[%s1185 + $0x8] sm:$0xf]
    %v1188 = vunpack.c.l.bf16 %v1186
    %v1189 = vunpack.c.h.bf16 %v1186
    %v1190 = vunpack.c.l.bf16 %v1187
    %v1191 = vpack.c.bf16 %v1182, %v1182
    %1192 = vmatprep.subr.bf16.mxu0 %v698
    %1193 = vmatpush1.bf16.msra.mxu0 %v697
    %1194 = vmatprep.subr.bf16.mxu0 %v701
    %1195 = vmatpush1.bf16.msra.mxu0 %v700
    %1196 = vmatprep.subr.bf16.mxu0 %v704
    %1197 = vmatpush1.bf16.msra.mxu0 %v703
    %1198 = vmatprep.subr.bf16.mxu0 %v707
    %1199 = vmatpush1.bf16.msra.mxu0 %v706
    %1200 = vmatprep.subr.bf16.mxu0 %v710
    %1201 = vmatpush1.bf16.msra.mxu0 %v709
    %1202 = vmatprep.subr.bf16.mxu0 %v713
    %1203 = vmatpush1.bf16.msra.mxu0 %v712
    %1204 = vmatprep.subr.bf16.mxu0 %v716
    %1205 = vmatpush1.bf16.msra.mxu0 %v715
    %1206 = vmatprep.subr.bf16.mxu0 %v719
    %1207 = vmatpush1.bf16.msra.mxu0 %v718
    %1208 = vmatprep.subr.bf16.mxu0 0
    %1209 = vmatpush1.bf16.msra.mxu0 0
    %1210 = vmatprep.subr.bf16.mxu0 0
    %1211 = vmatpush1.bf16.msra.mxu0 0
    %1212 = vmatprep.subr.bf16.mxu0 0
    %1213 = vmatpush1.bf16.msra.mxu0 0
    %1214 = vmatprep.subr.bf16.mxu0 0
    %1215 = vmatpush1.bf16.msra.mxu0 0
    %1216 = vmatprep.subr.bf16.mxu0 0
    %1217 = vmatpush1.bf16.msra.mxu0 0
    %1218 = vmatprep.subr.bf16.mxu0 0
    %1219 = vmatpush1.bf16.msra.mxu0 0
    %1220 = vmatprep.subr.bf16.mxu0 0
    %1221 = vmatpush1.bf16.msra.mxu0 0
    %1222 = vmatprep.subr.bf16.mxu0 0
    %1223 = vmatpush1.bf16.msra.mxu0 0
    %1224 = vmatprep.mubr.bf16.mxu0 0
    %1225 = vmatmul.mubr.bf16.gmra.mrb[0].mxu0 %v1191
    %v1226 = vpop.f32.mrb[0].mxu0
    %v1227 = vadd.f32 0.0, %v1226
    %v1228 = vpop.f32.mrb[0].mxu0
    %v1229 = vadd.f32 0.0, %v1228
    %v1230 = vpop.f32.mrb[0].mxu0
    %v1231 = vpop.f32.mrb[0].mxu0
    %1232 = vdwg.mxu0
    %1233 = vmatprep.subr.bf16.mxu0 0
    %1234 = vmatpush1.bf16.msra.mxu0 %v699
    %1235 = vmatprep.subr.bf16.mxu0 0
    %1236 = vmatpush1.bf16.msra.mxu0 %v702
    %1237 = vmatprep.subr.bf16.mxu0 0
    %1238 = vmatpush1.bf16.msra.mxu0 %v705
    %1239 = vmatprep.subr.bf16.mxu0 0
    %1240 = vmatpush1.bf16.msra.mxu0 %v708
    %1241 = vmatprep.subr.bf16.mxu0 0
    %1242 = vmatpush1.bf16.msra.mxu0 %v711
    %1243 = vmatprep.subr.bf16.mxu0 0
    %1244 = vmatpush1.bf16.msra.mxu0 %v714
    %1245 = vmatprep.subr.bf16.mxu0 0
    %1246 = vmatpush1.bf16.msra.mxu0 %v717
    %1247 = vmatprep.subr.bf16.mxu0 0
    %1248 = vmatpush1.bf16.msra.mxu0 %v720
    %1249 = vmatprep.subr.bf16.mxu0 0
    %1250 = vmatpush1.bf16.msra.mxu0 0
    %1251 = vmatprep.subr.bf16.mxu0 0
    %1252 = vmatpush1.bf16.msra.mxu0 0
    %1253 = vmatprep.subr.bf16.mxu0 0
    %1254 = vmatpush1.bf16.msra.mxu0 0
    %1255 = vmatprep.subr.bf16.mxu0 0
    %1256 = vmatpush1.bf16.msra.mxu0 0
    %1257 = vmatprep.subr.bf16.mxu0 0
    %1258 = vmatpush1.bf16.msra.mxu0 0
    %1259 = vmatprep.subr.bf16.mxu0 0
    %1260 = vmatpush1.bf16.msra.mxu0 0
    %1261 = vmatprep.subr.bf16.mxu0 0
    %1262 = vmatpush1.bf16.msra.mxu0 0
    %1263 = vmatprep.subr.bf16.mxu0 0
    %1264 = vmatpush1.bf16.msra.mxu0 0
    %1265 = vmatprep.mubr.bf16.mxu0 0
    %1266 = vmatmul.mubr.bf16.gmra.mrb[0].mxu0 %v1191
    %v1267 = vpop.f32.mrb[0].mxu0
    %v1268 = vadd.f32 0.0, %v1267
    %v1269 = vpop.f32.mrb[0].mxu0
    %v1270 = vpop.f32.mrb[0].mxu0
    %v1271 = vpop.f32.mrb[0].mxu0
    %1272 = vdwg.mxu0
    %v1273 = vadd.f32 %v1188, %v1227
    %v1274 = vxor.u32 %v1273, 2147483648
    %v1275 = vmul.f32 %v1274, 1.442695
    %v1276 = vpow.pop %v1275
    %v1277 = vadd.f32 %v1276, 1.0
    %v1278 = vrcp.pop %v1277
    %v1279 = vmul.f32 1.0, %v1278
    %v1280 = vadd.f32 %v1189, %v1229
    %v1281 = vxor.u32 %v1280, 2147483648
    %v1282 = vmul.f32 %v1281, 1.442695
    %v1283 = vpow.pop %v1282
    %v1284 = vadd.f32 %v1283, 1.0
    %v1285 = vrcp.pop %v1284
    %v1286 = vmul.f32 1.0, %v1285
    %v1287 = vadd.f32 %v1268, %v576
    %v1288 = vmul.f32 %v1279, %v1287
    %v1289 = vadd.f32 %v1190, %v1288
    %v1290 = vtanh.pop %v1289
    %v1291 = vsub.f32 1.0, %v1286
    %v1292 = vmul.f32 %v1291, %v1290
    %v1293 = vmul.f32 %v1286, %v1182
    %v1294 = vadd.f32 %v1292, %v1293
    %s1295 = scalar_lea.vmem [#allocation3], 32
    %1296 = vst [vmem:[%s1295] sm:$0xff] %v1294
    %s1297 = scalar_lea.vmem [#allocation2], 60
    %v1298 = vld [vmem:[%s1297] sm:$0xff]
    %v1299 = vld [vmem:[%s1297 + $0x8] sm:$0xf]
    %v1300 = vunpack.c.l.bf16 %v1298
    %v1301 = vunpack.c.h.bf16 %v1298
    %v1302 = vunpack.c.l.bf16 %v1299
    %v1303 = vpack.c.bf16 %v1294, %v1294
    %1304 = vmatprep.subr.bf16.mxu0 %v698
    %1305 = vmatpush1.bf16.msra.mxu0 %v697
    %1306 = vmatprep.subr.bf16.mxu0 %v701
    %1307 = vmatpush1.bf16.msra.mxu0 %v700
    %1308 = vmatprep.subr.bf16.mxu0 %v704
    %1309 = vmatpush1.bf16.msra.mxu0 %v703
    %1310 = vmatprep.subr.bf16.mxu0 %v707
    %1311 = vmatpush1.bf16.msra.mxu0 %v706
    %1312 = vmatprep.subr.bf16.mxu0 %v710
    %1313 = vmatpush1.bf16.msra.mxu0 %v709
    %1314 = vmatprep.subr.bf16.mxu0 %v713
    %1315 = vmatpush1.bf16.msra.mxu0 %v712
    %1316 = vmatprep.subr.bf16.mxu0 %v716
    %1317 = vmatpush1.bf16.msra.mxu0 %v715
    %1318 = vmatprep.subr.bf16.mxu0 %v719
    %1319 = vmatpush1.bf16.msra.mxu0 %v718
    %1320 = vmatprep.subr.bf16.mxu0 0
    %1321 = vmatpush1.bf16.msra.mxu0 0
    %1322 = vmatprep.subr.bf16.mxu0 0
    %1323 = vmatpush1.bf16.msra.mxu0 0
    %1324 = vmatprep.subr.bf16.mxu0 0
    %1325 = vmatpush1.bf16.msra.mxu0 0
    %1326 = vmatprep.subr.bf16.mxu0 0
    %1327 = vmatpush1.bf16.msra.mxu0 0
    %1328 = vmatprep.subr.bf16.mxu0 0
    %1329 = vmatpush1.bf16.msra.mxu0 0
    %1330 = vmatprep.subr.bf16.mxu0 0
    %1331 = vmatpush1.bf16.msra.mxu0 0
    %1332 = vmatprep.subr.bf16.mxu0 0
    %1333 = vmatpush1.bf16.msra.mxu0 0
    %1334 = vmatprep.subr.bf16.mxu0 0
    %1335 = vmatpush1.bf16.msra.mxu0 0
    %1336 = vmatprep.mubr.bf16.mxu0 0
    %1337 = vmatmul.mubr.bf16.gmra.mrb[0].mxu0 %v1303
    %v1338 = vpop.f32.mrb[0].mxu0
    %v1339 = vadd.f32 0.0, %v1338
    %v1340 = vpop.f32.mrb[0].mxu0
    %v1341 = vadd.f32 0.0, %v1340
    %v1342 = vpop.f32.mrb[0].mxu0
    %v1343 = vpop.f32.mrb[0].mxu0
    %1344 = vdwg.mxu0
    %1345 = vmatprep.subr.bf16.mxu0 0
    %1346 = vmatpush1.bf16.msra.mxu0 %v699
    %1347 = vmatprep.subr.bf16.mxu0 0
    %1348 = vmatpush1.bf16.msra.mxu0 %v702
    %1349 = vmatprep.subr.bf16.mxu0 0
    %1350 = vmatpush1.bf16.msra.mxu0 %v705
    %1351 = vmatprep.subr.bf16.mxu0 0
    %1352 = vmatpush1.bf16.msra.mxu0 %v708
    %1353 = vmatprep.subr.bf16.mxu0 0
    %1354 = vmatpush1.bf16.msra.mxu0 %v711
    %1355 = vmatprep.subr.bf16.mxu0 0
    %1356 = vmatpush1.bf16.msra.mxu0 %v714
    %1357 = vmatprep.subr.bf16.mxu0 0
    %1358 = vmatpush1.bf16.msra.mxu0 %v717
    %1359 = vmatprep.subr.bf16.mxu0 0
    %1360 = vmatpush1.bf16.msra.mxu0 %v720
    %1361 = vmatprep.subr.bf16.mxu0 0
    %1362 = vmatpush1.bf16.msra.mxu0 0
    %1363 = vmatprep.subr.bf16.mxu0 0
    %1364 = vmatpush1.bf16.msra.mxu0 0
    %1365 = vmatprep.subr.bf16.mxu0 0
    %1366 = vmatpush1.bf16.msra.mxu0 0
    %1367 = vmatprep.subr.bf16.mxu0 0
    %1368 = vmatpush1.bf16.msra.mxu0 0
    %1369 = vmatprep.subr.bf16.mxu0 0
    %1370 = vmatpush1.bf16.msra.mxu0 0
    %1371 = vmatprep.subr.bf16.mxu0 0
    %1372 = vmatpush1.bf16.msra.mxu0 0
    %1373 = vmatprep.subr.bf16.mxu0 0
    %1374 = vmatpush1.bf16.msra.mxu0 0
    %1375 = vmatprep.subr.bf16.mxu0 0
    %1376 = vmatpush1.bf16.msra.mxu0 0
    %1377 = vmatprep.mubr.bf16.mxu0 0
    %1378 = vmatmul.mubr.bf16.gmra.mrb[0].mxu0 %v1303
    %v1379 = vpop.f32.mrb[0].mxu0
    %v1380 = vadd.f32 0.0, %v1379
    %v1381 = vpop.f32.mrb[0].mxu0
    %v1382 = vpop.f32.mrb[0].mxu0
    %v1383 = vpop.f32.mrb[0].mxu0
    %1384 = vdwg.mxu0
    %v1385 = vadd.f32 %v1300, %v1339
    %v1386 = vxor.u32 %v1385, 2147483648
    %v1387 = vmul.f32 %v1386, 1.442695
    %v1388 = vpow.pop %v1387
    %v1389 = vadd.f32 %v1388, 1.0
    %v1390 = vrcp.pop %v1389
    %v1391 = vmul.f32 1.0, %v1390
    %v1392 = vadd.f32 %v1301, %v1341
    %v1393 = vxor.u32 %v1392, 2147483648
    %v1394 = vmul.f32 %v1393, 1.442695
    %v1395 = vpow.pop %v1394
    %v1396 = vadd.f32 %v1395, 1.0
    %v1397 = vrcp.pop %v1396
    %v1398 = vmul.f32 1.0, %v1397
    %v1399 = vadd.f32 %v1380, %v576
    %v1400 = vmul.f32 %v1391, %v1399
    %v1401 = vadd.f32 %v1302, %v1400
    %v1402 = vtanh.pop %v1401
    %v1403 = vsub.f32 1.0, %v1398
    %v1404 = vmul.f32 %v1403, %v1402
    %v1405 = vmul.f32 %v1398, %v1294
    %v1406 = vadd.f32 %v1404, %v1405
    %s1407 = scalar_lea.vmem [#allocation3], 40
    %1408 = vst [vmem:[%s1407] sm:$0xff] %v1406
    %s1409 = scalar_lea.vmem [#allocation2], 72
    %v1410 = vld [vmem:[%s1409] sm:$0xff]
    %v1411 = vld [vmem:[%s1409 + $0x8] sm:$0xf]
    %v1412 = vunpack.c.l.bf16 %v1410
    %v1413 = vunpack.c.h.bf16 %v1410
    %v1414 = vunpack.c.l.bf16 %v1411
    %v1415 = vpack.c.bf16 %v1406, %v1406
    %1416 = vmatprep.subr.bf16.mxu0 %v698
    %1417 = vmatpush1.bf16.msra.mxu0 %v697
    %1418 = vmatprep.subr.bf16.mxu0 %v701
    %1419 = vmatpush1.bf16.msra.mxu0 %v700
    %1420 = vmatprep.subr.bf16.mxu0 %v704
    %1421 = vmatpush1.bf16.msra.mxu0 %v703
    %1422 = vmatprep.subr.bf16.mxu0 %v707
    %1423 = vmatpush1.bf16.msra.mxu0 %v706
    %1424 = vmatprep.subr.bf16.mxu0 %v710
    %1425 = vmatpush1.bf16.msra.mxu0 %v709
    %1426 = vmatprep.subr.bf16.mxu0 %v713
    %1427 = vmatpush1.bf16.msra.mxu0 %v712
    %1428 = vmatprep.subr.bf16.mxu0 %v716
    %1429 = vmatpush1.bf16.msra.mxu0 %v715
    %1430 = vmatprep.subr.bf16.mxu0 %v719
    %1431 = vmatpush1.bf16.msra.mxu0 %v718
    %1432 = vmatprep.subr.bf16.mxu0 0
    %1433 = vmatpush1.bf16.msra.mxu0 0
    %1434 = vmatprep.subr.bf16.mxu0 0
    %1435 = vmatpush1.bf16.msra.mxu0 0
    %1436 = vmatprep.subr.bf16.mxu0 0
    %1437 = vmatpush1.bf16.msra.mxu0 0
    %1438 = vmatprep.subr.bf16.mxu0 0
    %1439 = vmatpush1.bf16.msra.mxu0 0
    %1440 = vmatprep.subr.bf16.mxu0 0
    %1441 = vmatpush1.bf16.msra.mxu0 0
    %1442 = vmatprep.subr.bf16.mxu0 0
    %1443 = vmatpush1.bf16.msra.mxu0 0
    %1444 = vmatprep.subr.bf16.mxu0 0
    %1445 = vmatpush1.bf16.msra.mxu0 0
    %1446 = vmatprep.subr.bf16.mxu0 0
    %1447 = vmatpush1.bf16.msra.mxu0 0
    %1448 = vmatprep.mubr.bf16.mxu0 0
    %1449 = vmatmul.mubr.bf16.gmra.mrb[0].mxu0 %v1415
    %v1450 = vpop.f32.mrb[0].mxu0
    %v1451 = vadd.f32 0.0, %v1450
    %v1452 = vpop.f32.mrb[0].mxu0
    %v1453 = vadd.f32 0.0, %v1452
    %v1454 = vpop.f32.mrb[0].mxu0
    %v1455 = vpop.f32.mrb[0].mxu0
    %1456 = vdwg.mxu0
    %1457 = vmatprep.subr.bf16.mxu0 0
    %1458 = vmatpush1.bf16.msra.mxu0 %v699
    %1459 = vmatprep.subr.bf16.mxu0 0
    %1460 = vmatpush1.bf16.msra.mxu0 %v702
    %1461 = vmatprep.subr.bf16.mxu0 0
    %1462 = vmatpush1.bf16.msra.mxu0 %v705
    %1463 = vmatprep.subr.bf16.mxu0 0
    %1464 = vmatpush1.bf16.msra.mxu0 %v708
    %1465 = vmatprep.subr.bf16.mxu0 0
    %1466 = vmatpush1.bf16.msra.mxu0 %v711
    %1467 = vmatprep.subr.bf16.mxu0 0
    %1468 = vmatpush1.bf16.msra.mxu0 %v714
    %1469 = vmatprep.subr.bf16.mxu0 0
    %1470 = vmatpush1.bf16.msra.mxu0 %v717
    %1471 = vmatprep.subr.bf16.mxu0 0
    %1472 = vmatpush1.bf16.msra.mxu0 %v720
    %1473 = vmatprep.subr.bf16.mxu0 0
    %1474 = vmatpush1.bf16.msra.mxu0 0
    %1475 = vmatprep.subr.bf16.mxu0 0
    %1476 = vmatpush1.bf16.msra.mxu0 0
    %1477 = vmatprep.subr.bf16.mxu0 0
    %1478 = vmatpush1.bf16.msra.mxu0 0
    %1479 = vmatprep.subr.bf16.mxu0 0
    %1480 = vmatpush1.bf16.msra.mxu0 0
    %1481 = vmatprep.subr.bf16.mxu0 0
    %1482 = vmatpush1.bf16.msra.mxu0 0
    %1483 = vmatprep.subr.bf16.mxu0 0
    %1484 = vmatpush1.bf16.msra.mxu0 0
    %1485 = vmatprep.subr.bf16.mxu0 0
    %1486 = vmatpush1.bf16.msra.mxu0 0
    %1487 = vmatprep.subr.bf16.mxu0 0
    %1488 = vmatpush1.bf16.msra.mxu0 0
    %1489 = vmatprep.mubr.bf16.mxu0 0
    %1490 = vmatmul.mubr.bf16.gmra.mrb[0].mxu0 %v1415
    %v1491 = vpop.f32.mrb[0].mxu0
    %v1492 = vadd.f32 0.0, %v1491
    %v1493 = vpop.f32.mrb[0].mxu0
    %v1494 = vpop.f32.mrb[0].mxu0
    %v1495 = vpop.f32.mrb[0].mxu0
    %1496 = vdwg.mxu0
    %v1497 = vadd.f32 %v1412, %v1451
    %v1498 = vxor.u32 %v1497, 2147483648
    %v1499 = vmul.f32 %v1498, 1.442695
    %v1500 = vpow.pop %v1499
    %v1501 = vadd.f32 %v1500, 1.0
    %v1502 = vrcp.pop %v1501
    %v1503 = vmul.f32 1.0, %v1502
    %v1504 = vadd.f32 %v1413, %v1453
    %v1505 = vxor.u32 %v1504, 2147483648
    %v1506 = vmul.f32 %v1505, 1.442695
    %v1507 = vpow.pop %v1506
    %v1508 = vadd.f32 %v1507, 1.0
    %v1509 = vrcp.pop %v1508
    %v1510 = vmul.f32 1.0, %v1509
    %v1511 = vadd.f32 %v1492, %v576
    %v1512 = vmul.f32 %v1503, %v1511
    %v1513 = vadd.f32 %v1414, %v1512
    %v1514 = vtanh.pop %v1513
    %v1515 = vsub.f32 1.0, %v1510
    %v1516 = vmul.f32 %v1515, %v1514
    %v1517 = vmul.f32 %v1510, %v1406
    %v1518 = vadd.f32 %v1516, %v1517
    %s1519 = scalar_lea.vmem [#allocation3], 48
    %1520 = vst [vmem:[%s1519] sm:$0xff] %v1518
    %s1521 = scalar_lea.vmem [#allocation2], 84
    %v1522 = vld [vmem:[%s1521] sm:$0xff]
    %v1523 = vld [vmem:[%s1521 + $0x8] sm:$0xf]
    %v1524 = vunpack.c.l.bf16 %v1522
    %v1525 = vunpack.c.h.bf16 %v1522
    %v1526 = vunpack.c.l.bf16 %v1523
    %v1527 = vpack.c.bf16 %v1518, %v1518
    %1528 = vmatprep.subr.bf16.mxu0 %v698
    %1529 = vmatpush1.bf16.msra.mxu0 %v697
    %1530 = vmatprep.subr.bf16.mxu0 %v701
    %1531 = vmatpush1.bf16.msra.mxu0 %v700
    %1532 = vmatprep.subr.bf16.mxu0 %v704
    %1533 = vmatpush1.bf16.msra.mxu0 %v703
    %1534 = vmatprep.subr.bf16.mxu0 %v707
    %1535 = vmatpush1.bf16.msra.mxu0 %v706
    %1536 = vmatprep.subr.bf16.mxu0 %v710
    %1537 = vmatpush1.bf16.msra.mxu0 %v709
    %1538 = vmatprep.subr.bf16.mxu0 %v713
    %1539 = vmatpush1.bf16.msra.mxu0 %v712
    %1540 = vmatprep.subr.bf16.mxu0 %v716
    %1541 = vmatpush1.bf16.msra.mxu0 %v715
    %1542 = vmatprep.subr.bf16.mxu0 %v719
    %1543 = vmatpush1.bf16.msra.mxu0 %v718
    %1544 = vmatprep.subr.bf16.mxu0 0
    %1545 = vmatpush1.bf16.msra.mxu0 0
    %1546 = vmatprep.subr.bf16.mxu0 0
    %1547 = vmatpush1.bf16.msra.mxu0 0
    %1548 = vmatprep.subr.bf16.mxu0 0
    %1549 = vmatpush1.bf16.msra.mxu0 0
    %1550 = vmatprep.subr.bf16.mxu0 0
    %1551 = vmatpush1.bf16.msra.mxu0 0
    %1552 = vmatprep.subr.bf16.mxu0 0
    %1553 = vmatpush1.bf16.msra.mxu0 0
    %1554 = vmatprep.subr.bf16.mxu0 0
    %1555 = vmatpush1.bf16.msra.mxu0 0
    %1556 = vmatprep.subr.bf16.mxu0 0
    %1557 = vmatpush1.bf16.msra.mxu0 0
    %1558 = vmatprep.subr.bf16.mxu0 0
    %1559 = vmatpush1.bf16.msra.mxu0 0
    %1560 = vmatprep.mubr.bf16.mxu0 0
    %1561 = vmatmul.mubr.bf16.gmra.mrb[0].mxu0 %v1527
    %v1562 = vpop.f32.mrb[0].mxu0
    %v1563 = vadd.f32 0.0, %v1562
    %v1564 = vpop.f32.mrb[0].mxu0
    %v1565 = vadd.f32 0.0, %v1564
    %v1566 = vpop.f32.mrb[0].mxu0
    %v1567 = vpop.f32.mrb[0].mxu0
    %1568 = vdwg.mxu0
    %1569 = vmatprep.subr.bf16.mxu0 0
    %1570 = vmatpush1.bf16.msra.mxu0 %v699
    %1571 = vmatprep.subr.bf16.mxu0 0
    %1572 = vmatpush1.bf16.msra.mxu0 %v702
    %1573 = vmatprep.subr.bf16.mxu0 0
    %1574 = vmatpush1.bf16.msra.mxu0 %v705
    %1575 = vmatprep.subr.bf16.mxu0 0
    %1576 = vmatpush1.bf16.msra.mxu0 %v708
    %1577 = vmatprep.subr.bf16.mxu0 0
    %1578 = vmatpush1.bf16.msra.mxu0 %v711
    %1579 = vmatprep.subr.bf16.mxu0 0
    %1580 = vmatpush1.bf16.msra.mxu0 %v714
    %1581 = vmatprep.subr.bf16.mxu0 0
    %1582 = vmatpush1.bf16.msra.mxu0 %v717
    %1583 = vmatprep.subr.bf16.mxu0 0
    %1584 = vmatpush1.bf16.msra.mxu0 %v720
    %1585 = vmatprep.subr.bf16.mxu0 0
    %1586 = vmatpush1.bf16.msra.mxu0 0
    %1587 = vmatprep.subr.bf16.mxu0 0
    %1588 = vmatpush1.bf16.msra.mxu0 0
    %1589 = vmatprep.subr.bf16.mxu0 0
    %1590 = vmatpush1.bf16.msra.mxu0 0
    %1591 = vmatprep.subr.bf16.mxu0 0
    %1592 = vmatpush1.bf16.msra.mxu0 0
    %1593 = vmatprep.subr.bf16.mxu0 0
    %1594 = vmatpush1.bf16.msra.mxu0 0
    %1595 = vmatprep.subr.bf16.mxu0 0
    %1596 = vmatpush1.bf16.msra.mxu0 0
    %1597 = vmatprep.subr.bf16.mxu0 0
    %1598 = vmatpush1.bf16.msra.mxu0 0
    %1599 = vmatprep.subr.bf16.mxu0 0
    %1600 = vmatpush1.bf16.msra.mxu0 0
    %1601 = vmatprep.mubr.bf16.mxu0 0
    %1602 = vmatmul.mubr.bf16.gmra.mrb[0].mxu0 %v1527
    %v1603 = vpop.f32.mrb[0].mxu0
    %v1604 = vadd.f32 0.0, %v1603
    %v1605 = vpop.f32.mrb[0].mxu0
    %v1606 = vpop.f32.mrb[0].mxu0
    %v1607 = vpop.f32.mrb[0].mxu0
    %1608 = vdwg.mxu0
    %v1609 = vadd.f32 %v1524, %v1563
    %v1610 = vxor.u32 %v1609, 2147483648
    %v1611 = vmul.f32 %v1610, 1.442695
    %v1612 = vpow.pop %v1611
    %v1613 = vadd.f32 %v1612, 1.0
    %v1614 = vrcp.pop %v1613
    %v1615 = vmul.f32 1.0, %v1614
    %v1616 = vadd.f32 %v1525, %v1565
    %v1617 = vxor.u32 %v1616, 2147483648
    %v1618 = vmul.f32 %v1617, 1.442695
    %v1619 = vpow.pop %v1618
    %v1620 = vadd.f32 %v1619, 1.0
    %v1621 = vrcp.pop %v1620
    %v1622 = vmul.f32 1.0, %v1621
    %v1623 = vadd.f32 %v1604, %v576
    %v1624 = vmul.f32 %v1615, %v1623
    %v1625 = vadd.f32 %v1526, %v1624
    %v1626 = vtanh.pop %v1625
    %v1627 = vsub.f32 1.0, %v1622
    %v1628 = vmul.f32 %v1627, %v1626
    %v1629 = vmul.f32 %v1622, %v1518
    %v1630 = vadd.f32 %v1628, %v1629
    %s1631 = scalar_lea.vmem [#allocation3], 56
    %1632 = vst [vmem:[%s1631] sm:$0xff] %v1630
    %1633 = vst [vmem:[#allocation15] sm:$0xff] %v1630
    %v1634 = vld [vmem:[#allocation3] sm:$0xff]
    %v1635 = vld [vmem:[#allocation3 + $0x8] sm:$0xff]
    %v1636 = vld [vmem:[#allocation3 + $0x10] sm:$0xff]
    %v1637 = vld [vmem:[#allocation3 + $0x18] sm:$0xff]
    %v1638 = vld [vmem:[#allocation3 + $0x20] sm:$0xff]
    %v1639 = vld [vmem:[#allocation3 + $0x28] sm:$0xff]
    %v1640 = vld [vmem:[#allocation3 + $0x30] sm:$0xff]
    %v1641 = vld [vmem:[#allocation3 + $0x38] sm:$0xff]
    %v1642 = vcombine.low %v1634, %v1636
    %v1643 = vcombine.high %v1634, %v1636
    %v1645 = vunpack.c.l.s4 1983009808
    %v1646 = vunpack.c.0.s8 %v1645
    %v1647 = vlaneseq
    %v1648 = vshrl.u32 %v1647, 7
    %v1649 = vsub.s32 %v1646, %v1648
    %v1650 = vrot.slane %v1642, %v1649
    %v1652 = vunpack.c.l.s4 1983009808
    %v1653 = vunpack.c.0.s8 %v1652
    %v1654 = vlaneseq
    %v1655 = vshrl.u32 %v1654, 7
    %v1656 = vsub.s32 %v1653, %v1655
    %v1657 = vrot.slane %v1643, %v1656
    %v1658 = vcombine.low %v1635, %v1637
    %v1659 = vcombine.high %v1635, %v1637
    %v1661 = vunpack.c.l.s4 1983009808
    %v1662 = vunpack.c.0.s8 %v1661
    %v1663 = vlaneseq
    %v1664 = vshrl.u32 %v1663, 7
    %v1665 = vsub.s32 %v1662, %v1664
    %v1666 = vrot.slane %v1658, %v1665
    %v1668 = vunpack.c.l.s4 1983009808
    %v1669 = vunpack.c.0.s8 %v1668
    %v1670 = vlaneseq
    %v1671 = vshrl.u32 %v1670, 7
    %v1672 = vsub.s32 %v1669, %v1671
    %v1673 = vrot.slane %v1659, %v1672
    %v1674 = vcombine.low %v1638, %v1640
    %v1675 = vcombine.high %v1638, %v1640
    %v1677 = vunpack.c.l.s4 1983009808
    %v1678 = vunpack.c.0.s8 %v1677
    %v1679 = vlaneseq
    %v1680 = vshrl.u32 %v1679, 7
    %v1681 = vsub.s32 %v1678, %v1680
    %v1682 = vrot.slane %v1674, %v1681
    %v1684 = vunpack.c.l.s4 1983009808
    %v1685 = vunpack.c.0.s8 %v1684
    %v1686 = vlaneseq
    %v1687 = vshrl.u32 %v1686, 7
    %v1688 = vsub.s32 %v1685, %v1687
    %v1689 = vrot.slane %v1675, %v1688
    %v1690 = vcombine.low %v1639, %v1641
    %v1691 = vcombine.high %v1639, %v1641
    %v1693 = vunpack.c.l.s4 1983009808
    %v1694 = vunpack.c.0.s8 %v1693
    %v1695 = vlaneseq
    %v1696 = vshrl.u32 %v1695, 7
    %v1697 = vsub.s32 %v1694, %v1696
    %v1698 = vrot.slane %v1690, %v1697
    %v1700 = vunpack.c.l.s4 1983009808
    %v1701 = vunpack.c.0.s8 %v1700
    %v1702 = vlaneseq
    %v1703 = vshrl.u32 %v1702, 7
    %v1704 = vsub.s32 %v1701, %v1703
    %v1705 = vrot.slane %v1691, %v1704
    %v1706 = vcombine.low %v1650, %v1666
    %v1707 = vcombine.high %v1650, %v1666
    %v1709 = vunpack.c.l.s4 1934713408
    %v1710 = vunpack.c.0.s8 %v1709
    %v1711 = vlaneseq
    %v1712 = vshrl.u32 %v1711, 7
    %v1713 = vsub.s32 %v1710, %v1712
    %v1714 = vrot.slane %v1706, %v1713
    %v1716 = vunpack.c.l.s4 1934713408
    %v1717 = vunpack.c.0.s8 %v1716
    %v1718 = vlaneseq
    %v1719 = vshrl.u32 %v1718, 7
    %v1720 = vsub.s32 %v1717, %v1719
    %v1721 = vrot.slane %v1707, %v1720
    %v1722 = vcombine.low %v1657, %v1673
    %v1723 = vcombine.high %v1657, %v1673
    %v1725 = vunpack.c.l.s4 1934713408
    %v1726 = vunpack.c.0.s8 %v1725
    %v1727 = vlaneseq
    %v1728 = vshrl.u32 %v1727, 7
    %v1729 = vsub.s32 %v1726, %v1728
    %v1730 = vrot.slane %v1722, %v1729
    %v1732 = vunpack.c.l.s4 1934713408
    %v1733 = vunpack.c.0.s8 %v1732
    %v1734 = vlaneseq
    %v1735 = vshrl.u32 %v1734, 7
    %v1736 = vsub.s32 %v1733, %v1735
    %v1737 = vrot.slane %v1723, %v1736
    %v1738 = vcombine.low %v1682, %v1698
    %v1739 = vcombine.high %v1682, %v1698
    %v1741 = vunpack.c.l.s4 1934713408
    %v1742 = vunpack.c.0.s8 %v1741
    %v1743 = vlaneseq
    %v1744 = vshrl.u32 %v1743, 7
    %v1745 = vsub.s32 %v1742, %v1744
    %v1746 = vrot.slane %v1738, %v1745
    %v1748 = vunpack.c.l.s4 1934713408
    %v1749 = vunpack.c.0.s8 %v1748
    %v1750 = vlaneseq
    %v1751 = vshrl.u32 %v1750, 7
    %v1752 = vsub.s32 %v1749, %v1751
    %v1753 = vrot.slane %v1739, %v1752
    %v1754 = vcombine.low %v1689, %v1705
    %v1755 = vcombine.high %v1689, %v1705
    %v1757 = vunpack.c.l.s4 1934713408
    %v1758 = vunpack.c.0.s8 %v1757
    %v1759 = vlaneseq
    %v1760 = vshrl.u32 %v1759, 7
    %v1761 = vsub.s32 %v1758, %v1760
    %v1762 = vrot.slane %v1754, %v1761
    %v1764 = vunpack.c.l.s4 1934713408
    %v1765 = vunpack.c.0.s8 %v1764
    %v1766 = vlaneseq
    %v1767 = vshrl.u32 %v1766, 7
    %v1768 = vsub.s32 %v1765, %v1767
    %v1769 = vrot.slane %v1755, %v1768
    %v1770 = vcombine.low %v1714, %v1746
    %v1771 = vcombine.high %v1714, %v1746
    %v1772 = vcombine.low %v1721, %v1753
    %v1773 = vcombine.high %v1721, %v1753
    %v1774 = vcombine.low %v1730, %v1762
    %v1775 = vcombine.high %v1730, %v1762
    %v1776 = vcombine.low %v1737, %v1769
    %v1777 = vcombine.high %v1737, %v1769
    %s1778 = smul.u32 4, 16
    %s1779 = smul.u32 %s1778, 1
    %s1780 = sshll.u32 %s1779, 4
    %1781 = dma.done [#allocation5], %s1780
    %v1782 = vpack.c.bf16 %v1771, %v1770
    %v1783 = vpack.c.bf16 %v1773, %v1772
    %v1784 = vpack.c.bf16 %v1775, %v1774
    %v1785 = vpack.c.bf16 %v1777, %v1776
    %v1786 = vld [vmem:[#allocation4] sm:$0xff]
    %v1787 = vld [vmem:[#allocation4 + $0x8] sm:$0xff]
    %v1788 = vld [vmem:[#allocation4 + $0x10] sm:$0xff]
    %v1789 = vld [vmem:[#allocation4 + $0x18] sm:$0xff]
    %v1790 = vld [vmem:[#allocation4 + $0x20] sm:$0xff]
    %v1791 = vld [vmem:[#allocation4 + $0x28] sm:$0xff]
    %v1792 = vld [vmem:[#allocation4 + $0x30] sm:$0xff]
    %v1793 = vld [vmem:[#allocation4 + $0x38] sm:$0xff]
    %v1794 = vld [vmem:[%s7] sm:$0x1]
    %v1796 = vlaneseq
    %v1797 = vshrl.u32 %v1796, 7
    %v1798 = vsub.s32 0, %v1797
    %v1799 = vrot.slane %v1794, %v1798
    %1801 = vmatprep.subr.bf16.mxu0 0
    %1802 = vmatpush1.bf16.msra.mxu0 %v1786
    %1803 = vmatprep.subr.bf16.mxu0 0
    %1804 = vmatpush1.bf16.msra.mxu0 %v1787
    %1805 = vmatprep.subr.bf16.mxu0 0
    %1806 = vmatpush1.bf16.msra.mxu0 %v1788
    %1807 = vmatprep.subr.bf16.mxu0 0
    %1808 = vmatpush1.bf16.msra.mxu0 %v1789
    %1809 = vmatprep.subr.bf16.mxu0 0
    %1810 = vmatpush1.bf16.msra.mxu0 %v1790
    %1811 = vmatprep.subr.bf16.mxu0 0
    %1812 = vmatpush1.bf16.msra.mxu0 %v1791
    %1813 = vmatprep.subr.bf16.mxu0 0
    %1814 = vmatpush1.bf16.msra.mxu0 %v1792
    %1815 = vmatprep.subr.bf16.mxu0 0
    %1816 = vmatpush1.bf16.msra.mxu0 %v1793
    %1817 = vmatprep.subr.bf16.mxu0 0
    %1818 = vmatpush1.bf16.msra.mxu0 0
    %1819 = vmatprep.subr.bf16.mxu0 0
    %1820 = vmatpush1.bf16.msra.mxu0 0
    %1821 = vmatprep.subr.bf16.mxu0 0
    %1822 = vmatpush1.bf16.msra.mxu0 0
    %1823 = vmatprep.subr.bf16.mxu0 0
    %1824 = vmatpush1.bf16.msra.mxu0 0
    %1825 = vmatprep.subr.bf16.mxu0 0
    %1826 = vmatpush1.bf16.msra.mxu0 0
    %1827 = vmatprep.subr.bf16.mxu0 0
    %1828 = vmatpush1.bf16.msra.mxu0 0
    %1829 = vmatprep.subr.bf16.mxu0 0
    %1830 = vmatpush1.bf16.msra.mxu0 0
    %1831 = vmatprep.subr.bf16.mxu0 0
    %1832 = vmatpush1.bf16.msra.mxu0 0
    %1833 = vmatprep.mubr.bf16.mxu0 0
    %1834 = vmatmul.mubr.bf16.gmra.mrb[0].mxu0 %v1782
    %v1835 = vpop.f32.mrb[0].mxu0
    %v1836 = vadd.f32 %v1799, %v1835
    %v1837 = vpop.f32.mrb[0].mxu0
    %v1838 = vpop.f32.mrb[0].mxu0
    %v1839 = vadd.f32 %v1799, %v1838
    %v1840 = vpop.f32.mrb[0].mxu0
    %1841 = vmatprep.mubr.bf16.mxu0 0
    %1842 = vmatmul.mubr.bf16.gmra.mrb[0].mxu0 %v1783
    %v1843 = vpop.f32.mrb[0].mxu0
    %v1844 = vadd.f32 %v1799, %v1843
    %v1845 = vpop.f32.mrb[0].mxu0
    %v1846 = vpop.f32.mrb[0].mxu0
    %v1847 = vadd.f32 %v1799, %v1846
    %v1848 = vpop.f32.mrb[0].mxu0
    %1849 = vmatprep.mubr.bf16.mxu0 0
    %1850 = vmatmul.mubr.bf16.gmra.mrb[0].mxu0 %v1784
    %v1851 = vpop.f32.mrb[0].mxu0
    %v1852 = vadd.f32 %v1799, %v1851
    %v1853 = vpop.f32.mrb[0].mxu0
    %v1854 = vpop.f32.mrb[0].mxu0
    %v1855 = vadd.f32 %v1799, %v1854
    %v1856 = vpop.f32.mrb[0].mxu0
    %1857 = vmatprep.mubr.bf16.mxu0 0
    %1858 = vmatmul.mubr.bf16.gmra.mrb[0].mxu0 %v1785
    %v1859 = vpop.f32.mrb[0].mxu0
    %v1860 = vadd.f32 %v1799, %v1859
    %v1861 = vpop.f32.mrb[0].mxu0
    %v1862 = vpop.f32.mrb[0].mxu0
    %v1863 = vadd.f32 %v1799, %v1862
    %v1864 = vpop.f32.mrb[0].mxu0
    %1865 = vdwg.mxu0
    %1866 = vmax.xlane.f32.xlu0 %v1836
    %v1867 = vpop.xlane.xlu0 %1866
    %1868 = vmax.xlane.f32.xlu0 %v1839
    %v1869 = vpop.xlane.xlu0 %1868
    %1870 = vmax.xlane.f32.xlu0 %v1844
    %v1871 = vpop.xlane.xlu0 %1870
    %1872 = vmax.xlane.f32.xlu0 %v1847
    %v1873 = vpop.xlane.xlu0 %1872
    %1874 = vmax.xlane.f32.xlu0 %v1852
    %v1875 = vpop.xlane.xlu0 %1874
    %1876 = vmax.xlane.f32.xlu0 %v1855
    %v1877 = vpop.xlane.xlu0 %1876
    %1878 = vmax.xlane.f32.xlu0 %v1860
    %v1879 = vpop.xlane.xlu0 %1878
    %1880 = vmax.xlane.f32.xlu0 %v1863
    %v1881 = vpop.xlane.xlu0 %1880
    %v1882 = vsub.f32 %v1836, %v1867
    %v1883 = vsub.f32 %v1839, %v1869
    %v1884 = vsub.f32 %v1844, %v1871
    %v1885 = vsub.f32 %v1847, %v1873
    %v1886 = vsub.f32 %v1852, %v1875
    %v1887 = vsub.f32 %v1855, %v1877
    %v1888 = vsub.f32 %v1860, %v1879
    %v1889 = vsub.f32 %v1863, %v1881
    %v1890 = vmul.f32 %v1882, 1.442695
    %v1891 = vpow.pop %v1890
    %v1892 = vmul.f32 %v1883, 1.442695
    %v1893 = vpow.pop %v1892
    %v1894 = vmul.f32 %v1884, 1.442695
    %v1895 = vpow.pop %v1894
    %v1896 = vmul.f32 %v1885, 1.442695
    %v1897 = vpow.pop %v1896
    %v1898 = vmul.f32 %v1886, 1.442695
    %v1899 = vpow.pop %v1898
    %v1900 = vmul.f32 %v1887, 1.442695
    %v1901 = vpow.pop %v1900
    %v1902 = vmul.f32 %v1888, 1.442695
    %v1903 = vpow.pop %v1902
    %v1904 = vmul.f32 %v1889, 1.442695
    %v1905 = vpow.pop %v1904
    %1906 = vadd.xlane.f32.xlu0 %v1891
    %v1907 = vpop.xlane.xlu0 %1906
    %1908 = vadd.xlane.f32.xlu0 %v1893
    %v1909 = vpop.xlane.xlu0 %1908
    %1910 = vadd.xlane.f32.xlu0 %v1895
    %v1911 = vpop.xlane.xlu0 %1910
    %1912 = vadd.xlane.f32.xlu0 %v1897
    %v1913 = vpop.xlane.xlu0 %1912
    %1914 = vadd.xlane.f32.xlu0 %v1899
    %v1915 = vpop.xlane.xlu0 %1914
    %1916 = vadd.xlane.f32.xlu0 %v1901
    %v1917 = vpop.xlane.xlu0 %1916
    %1918 = vadd.xlane.f32.xlu0 %v1903
    %v1919 = vpop.xlane.xlu0 %1918
    %1920 = vadd.xlane.f32.xlu0 %v1905
    %v1921 = vpop.xlane.xlu0 %1920
    %v1922 = vlog2.pop %v1907
    %v1923 = vmul.f32 %v1922, 0.6931472
    %v1924 = vlog2.pop %v1909
    %v1925 = vmul.f32 %v1924, 0.6931472
    %v1926 = vlog2.pop %v1911
    %v1927 = vmul.f32 %v1926, 0.6931472
    %v1928 = vlog2.pop %v1913
    %v1929 = vmul.f32 %v1928, 0.6931472
    %v1930 = vlog2.pop %v1915
    %v1931 = vmul.f32 %v1930, 0.6931472
    %v1932 = vlog2.pop %v1917
    %v1933 = vmul.f32 %v1932, 0.6931472
    %v1934 = vlog2.pop %v1919
    %v1935 = vmul.f32 %v1934, 0.6931472
    %v1936 = vlog2.pop %v1921
    %v1937 = vmul.f32 %v1936, 0.6931472
    %v1938 = vsub.f32 %v1882, %v1923
    %v1939 = vsub.f32 %v1883, %v1925
    %v1940 = vsub.f32 %v1884, %v1927
    %v1941 = vsub.f32 %v1885, %v1929
    %v1942 = vsub.f32 %v1886, %v1931
    %v1943 = vsub.f32 %v1887, %v1933
    %v1944 = vsub.f32 %v1888, %v1935
    %v1945 = vsub.f32 %v1889, %v1937
    %1946 = vst [vmem:[#allocation14] sm:$0xff] %v1938
    %1947 = vst [vmem:[#allocation14 + $0x8] sm:$0xff] %v1939
    %1948 = vst [vmem:[#allocation14 + $0x10] sm:$0xff] %v1940
    %1949 = vst [vmem:[#allocation14 + $0x18] sm:$0xff] %v1941
    %1950 = vst [vmem:[#allocation14 + $0x20] sm:$0xff] %v1942
    %1951 = vst [vmem:[#allocation14 + $0x28] sm:$0xff] %v1943
    %1952 = vst [vmem:[#allocation14 + $0x30] sm:$0xff] %v1944
    %1953 = vst [vmem:[#allocation14 + $0x38] sm:$0xff] %v1945
    // Predicated region
    $region50: #{tpu_custom_call.1} parent=1 // pred_check
      _
    $region51: #{tpu_custom_call.1} parent=1 // pred_check_branch
      %1955 = sbr.rel (0) target = $region53
    $region52: #{tpu_custom_call.1} parent=1 // pred_region
      %s1957 = ssub.s32 1024, 1024
      %1958 = vsyncadd [#allocation8], %s1957
      %s1959 = sshll.u32 [#allocation14], 4
      %s1960 = int_to_ptr.vmem [resolvable:$true] %s1959
      %1965 = dma.vmem_to_hbm [thread:$0]  %s1960, 1024, %s8, [#allocation8], 128, 128, 8
    $region53: #{tpu_custom_call.1} parent=1 // pred_fallthru
      _
    // Predicated region
    $region54: #{tpu_custom_call.1} parent=1 // pred_check
      _
    $region55: #{tpu_custom_call.1} parent=1 // pred_check_branch
      %1967 = sbr.rel (0) target = $region57
    $region56: #{tpu_custom_call.1} parent=1 // pred_region
      %s1969 = ssub.s32 128, 128
      %1970 = vsyncadd [#allocation16], %s1969
      %s1972 = sshll.u32 [#allocation15], 4
      %s1973 = int_to_ptr.vmem [resolvable:$true] %s1972
      %1975 = dma.vmem_to_hbm [thread:$0]  %s1973, 128, %s9, [#allocation16]
    $region57: #{tpu_custom_call.1} parent=1 // pred_fallthru
      _
    // Predicated region
    $region58: #{tpu_custom_call.1} parent=1 // pred_check
      _
    $region59: #{tpu_custom_call.1} parent=1 // pred_check_branch
      %1977 = sbr.rel (0) target = $region61
    $region60: #{tpu_custom_call.1} parent=1 // pred_region
      %1978 = dma.done [#allocation8], 1024
    $region61: #{tpu_custom_call.1} parent=1 // pred_fallthru
      _
    // Predicated region
    $region62: #{tpu_custom_call.1} parent=1 // pred_check
      _
    $region63: #{tpu_custom_call.1} parent=1 // pred_check_branch
      %1980 = sbr.rel (0) target = $region65
    $region64: #{tpu_custom_call.1} parent=1 // pred_region
      %1981 = dma.done [#allocation16], 128
    $region65: #{tpu_custom_call.1} parent=1 // pred_fallthru
      _
    %1982 = vsyncpa [#allocation7], 1
    %1983 = vsyncpa [#allocation10], 1
    %1984 = vsyncpa [#allocation13], 1
    %1985 = vsyncpa [#allocation8], 1
    %1986 = vsyncpa [#allocation16], 1
  %1987 = vsyncmov [#allocation5]
  %s1988 = vpop.sfrf %1987
  %p1989 = scmp.eq.s32.totalorder %s1988, 0
  %p1990 = pneg %p1989
  %1992 = shalt.err (%p1990)

</llo_original>
